<compile_context>
chip_gen: v7x
topology: tpu7x:2x2x1
jax: 0.10.0
libtpu: 0.0.40
codegen_flags: <defaults>
</compile_context>

<pallas_src>
import functools

import jax
import jax.numpy as jnp
from jax import lax
from jax.experimental import pallas as pl
from jax.experimental.pallas import tpu as pltpu


def _pick_ffn_chunk(ffn_dim):
    if ffn_dim <= 512:
        return ffn_dim
    for c in (512, 256, 128):
        if ffn_dim % c == 0:
            return c
    return ffn_dim


def _pick_batch_tile(batch, seq):
    """Batch elements per grid step.

    Aim for >= ~256 matmul rows per step (MXU M width on v6e/v7x) but keep the
    grid length >= 2 so dimension_semantics=("parallel",) can shard steps
    across both v7x TensorCores."""
    target_rows = 256
    bt = max(1, min(batch, target_rows // max(seq, 1)))
    while batch % bt:
        bt -= 1
    if batch // bt < 2 and batch >= 2:
        bt = batch // 2
        while batch % bt:
            bt -= 1
    return max(bt, 1)


def _layer_norm(t, w, b, eps):
    mu = jnp.mean(t, axis=-1, keepdims=True)
    var = jnp.mean(jnp.square(t - mu), axis=-1, keepdims=True)
    return (t - mu) * lax.rsqrt(var + eps) * w + b


# Rows of the packed (9, D) per-channel vector slab.
_BQ, _BK, _BV, _BO, _B2, _LN1W, _LN1B, _LN2W, _LN2B = range(9)


def _encoder_layer_kernel(*refs, nhead, eps, has_pos, num_ffn_chunks):
    it = iter(refs)
    x_ref = next(it)
    pos_ref = next(it) if has_pos else None
    (wqk_ref, wv_ref, wo_ref, w1_ref, b1_ref, w2_ref, vec_ref,
     o_ref, ffn_acc_ref) = it

    H = nhead
    x3 = x_ref[...].astype(jnp.float32)            # (Bt, S, D)
    Bt, S, D = x3.shape
    dh = D // H
    M = Bt * S

    x = x3.reshape(M, D)                            # merge leading dims (lane dim intact)
    x_bf = x.astype(jnp.bfloat16)
    if pos_ref is None:
        qk_in_bf = x_bf
    else:
        qk_in_bf = (x + pos_ref[...].astype(jnp.float32).reshape(M, D)).astype(jnp.bfloat16)

    vec = vec_ref[...]                              # (9, D) f32 packed biases / LN params

    # ---- flat, lane-dense projections on the MXU (f32 accumulation) ----
    # Fused Q|K: (M, D) @ (D, 2D); 1/sqrt(dh) pre-folded into wq / bq offline.
    qk = jnp.dot(qk_in_bf, wqk_ref[...], preferred_element_type=jnp.float32)    # (M, 2D)
    q = qk[:, :D] + vec[_BQ:_BQ + 1, :]
    k = qk[:, D:] + vec[_BK:_BK + 1, :]
    # V consumes src WITHOUT pos_embed (matches the module).
    v = jnp.dot(x_bf, wv_ref[...], preferred_element_type=jnp.float32) + vec[_BV:_BV + 1, :]

    # ---- split into (batch, head) groups only for the attention einsums ----
    def to_groups(t):  # (M, D) -> (Bt*H, S, dh) via static slices + leading-dim stack
        parts = []
        for b in range(Bt):
            rows = t[b * S:(b + 1) * S, :]
            for h in range(H):
                parts.append(rows[:, h * dh:(h + 1) * dh])
        return jnp.stack(parts, axis=0)

    qg = to_groups(q).astype(jnp.bfloat16)          # (G, S, dh), G = Bt*H
    kg = to_groups(k).astype(jnp.bfloat16)
    vg = to_groups(v).astype(jnp.bfloat16)

    # TODO(synk): src_mask / key_padding_mask not wired in; module is used with src_mask=None.
    # TODO(synk): for long sequences switch to a kv-tile loop with an online (flash-style)
    # softmax so the (G, S, S) scores stay bounded in VMEM (threshold is roughly half the
    # sequence length on v7x's 64 MiB VMEM vs v5e/v6e's 128 MiB).
    s = jnp.einsum("gqe,gke->gqk", qg, kg, preferred_element_type=jnp.float32)   # (G, S, S)
    m = jnp.max(s, axis=-1, keepdims=True)
    p = jnp.exp(s - m)
    denom = jnp.sum(p, axis=-1, keepdims=True)
    # Approx reciprocal rides the EUP slot; ~1e-3 rel-err per row — fine at this tolerance.
    p = p * pl.reciprocal(denom, approx=True)

    og = jnp.einsum("gqk,gke->gqe", p.astype(jnp.bfloat16), vg,
                    preferred_element_type=jnp.float32)                           # (G, S, dh)

    # ---- merge heads back onto lanes, then ONE flat (M, D) @ (D, D) out-projection ----
    rows_out = []
    for b in range(Bt):
        rows_out.append(jnp.concatenate([og[b * H + h] for h in range(H)], axis=-1))  # (S, D)
    attn_in = jnp.concatenate(rows_out, axis=0).astype(jnp.bfloat16)                   # (M, D)
    attn = (jnp.dot(attn_in, wo_ref[...], preferred_element_type=jnp.float32)
            + vec[_BO:_BO + 1, :])

    # ---- residual + LayerNorm1 (post-norm) ----
    y = _layer_norm(x + attn, vec[_LN1W:_LN1W + 1, :], vec[_LN1B:_LN1B + 1, :], eps)

    # ---- FFN: linear1 -> ReLU -> linear2, chunked over the feedforward dim;
    #      accumulate into VMEM scratch to bound vreg pressure at large M ----
    y_bf = y.astype(jnp.bfloat16)
    ffn_acc_ref[...] = jnp.zeros_like(ffn_acc_ref)

    def ffn_body(c, carry):
        h = jnp.dot(y_bf, w1_ref[c], preferred_element_type=jnp.float32) + b1_ref[c]
        h = jnp.maximum(h, 0.0)
        ffn_acc_ref[...] += jnp.dot(h.astype(jnp.bfloat16), w2_ref[c],
                                    preferred_element_type=jnp.float32)
        return carry

    lax.fori_loop(0, num_ffn_chunks, ffn_body, 0, unroll=True)
    f = ffn_acc_ref[...] + vec[_B2:_B2 + 1, :]

    # ---- residual + LayerNorm2 ----
    z = _layer_norm(y + f, vec[_LN2W:_LN2W + 1, :], vec[_LN2B:_LN2B + 1, :], eps)
    o_ref[...] = z.reshape(Bt, S, D).astype(o_ref.dtype)


def transformer_encoder_layer(src, params, pos_embed=None, *, nhead, eps=1e-5):
    """src: (B, S, D) float32 (batch_first).  Returns (B, S, D)."""
    B, S, D = src.shape
    H = nhead
    assert D % H == 0, "d_model must be divisible by nhead"
    dh = D // H
    ffn_dim = params["w1"].shape[1]
    scale = 1.0 / float(dh) ** 0.5
    wdt = jnp.bfloat16  # MXU operand dtype; accumulation stays f32

    # ---- weight prep (once, wrapper level): flat lane-dense layouts ----
    wqk = jnp.concatenate([params["wq"] * scale, params["wk"]], axis=1).astype(wdt)   # (D, 2D)
    wv = params["wv"].astype(wdt)                                                     # (D, D)
    wo = params["wo"].astype(wdt)                                                     # (D, D)

    chunk = _pick_ffn_chunk(ffn_dim)
    n_chunks = ffn_dim // chunk
    w1 = params["w1"].reshape(D, n_chunks, chunk).transpose(1, 0, 2).astype(wdt)      # (C, D, chunk)
    b1 = params["b1"].reshape(n_chunks, 1, chunk).astype(jnp.float32)                 # (C, 1, chunk)
    w2 = params["w2"].reshape(n_chunks, chunk, D).astype(wdt)                          # (C, chunk, D)

    # All tiny per-channel vectors packed into one (9, D) slab (one operand / DMA).
    vec = jnp.concatenate([
        (params["bq"] * scale).reshape(1, D),
        params["bk"].reshape(1, D),
        params["bv"].reshape(1, D),
        params["bo"].reshape(1, D),
        params["b2"].reshape(1, D),
        params["ln1_w"].reshape(1, D),
        params["ln1_b"].reshape(1, D),
        params["ln2_w"].reshape(1, D),
        params["ln2_b"].reshape(1, D),
    ], axis=0).astype(jnp.float32)

    has_pos = pos_embed is not None
    Bt = _pick_batch_tile(B, S)
    grid = (B // Bt,)
    M = Bt * S

    act_spec = pl.BlockSpec((Bt, S, D), lambda i: (i, 0, 0))
    # Grid-invariant weights: whole-array VMEM residency (single-buffered, no
    # per-step pipelining) — replaces the pl.Buffered(1) + try/except fallback.
    vmem_spec = pl.BlockSpec(memory_space=pltpu.MemorySpace.VMEM)

    in_specs = [act_spec]
    operands = [src]
    if has_pos:
        in_specs.append(pl.BlockSpec((Bt, S, D), lambda i: (i, 0, 0)))
        operands.append(pos_embed)
    consts = [wqk, wv, wo, w1, b1, w2, vec]
    in_specs += [vmem_spec] * len(consts)
    operands += consts

    kernel = functools.partial(_encoder_layer_kernel, nhead=H, eps=eps,
                               has_pos=has_pos, num_ffn_chunks=n_chunks)

    call = pl.pallas_call(
        kernel,
        out_shape=jax.ShapeDtypeStruct((B, S, D), src.dtype),
        grid_spec=pltpu.PrefetchScalarGridSpec(
            num_scalar_prefetch=0,
            grid=grid,
            in_specs=in_specs,
            out_specs=pl.BlockSpec((Bt, S, D), lambda i: (i, 0, 0)),
            scratch_shapes=[pltpu.VMEM((M, D), jnp.float32)],   # FFN accumulator
        ),
        compiler_params=pltpu.CompilerParams(
            dimension_semantics=("parallel",),
            # < v7x's 64 MiB physical VMEM (headroom for compiler scratch),
            # > the 16/32 MiB default scoped limits on v5e/v6e.
            vmem_limit_bytes=48 * 1024 * 1024,
        ),
    )
    return call(*operands)


def _reference_jax(src, params, pos_embed, nhead, eps=1e-5):
    """Pure-JAX f32 reference mirroring the PyTorch forward (eval mode)."""
    B, S, D = src.shape
    dh = D // nhead
    scale = 1.0 / dh ** 0.5
    qk_in = src if pos_embed is None else src + pos_embed
    q = qk_in @ params["wq"] + params["bq"]
    k = qk_in @ params["wk"] + params["bk"]
    v = src @ params["wv"] + params["bv"]

    def split(t):  # (B, S, D) -> (B, H, S, dh)
        return t.reshape(B, S, nhead, dh).transpose(0, 2, 1, 3)

    qh, kh, vh = split(q) * scale, split(k), split(v)
    s = jnp.einsum("bhqd,bhkd->bhqk", qh, kh)
    p = jax.nn.softmax(s, axis=-1)
    o = jnp.einsum("bhqk,bhkd->bhqd", p, vh)
    attn = o.transpose(0, 2, 1, 3).reshape(B, S, D)
    attn = attn @ params["wo"] + params["bo"]

    def ln(x, w, b):
        mu = jnp.mean(x, axis=-1, keepdims=True)
        var = jnp.mean((x - mu) ** 2, axis=-1, keepdims=True)
        return (x - mu) * lax.rsqrt(var + eps) * w + b

    y = ln(src + attn, params["ln1_w"], params["ln1_b"])
    f = jnp.maximum(y @ params["w1"] + params["b1"], 0.0) @ params["w2"] + params["b2"]
    return ln(y + f, params["ln2_w"], params["ln2_b"])


def _init_params(key, d_model, nhead, dim_feedforward):
    ks = jax.random.split(key, 10)
    sc = 0.1
    return {
        "wq": sc * jax.random.normal(ks[0], (d_model, d_model), jnp.float32),
        "wk": sc * jax.random.normal(ks[1], (d_model, d_model), jnp.float32),
        "wv": sc * jax.random.normal(ks[2], (d_model, d_model), jnp.float32),
        "wo": sc * jax.random.normal(ks[3], (d_model, d_model), jnp.float32),
        "bq": sc * jax.random.normal(ks[4], (1, d_model), jnp.float32),
        "bk": sc * jax.random.normal(ks[5], (1, d_model), jnp.float32),
        "bv": sc * jax.random.normal(ks[6], (1, d_model), jnp.float32),
        "bo": jnp.zeros((1, d_model), jnp.float32),
        "ln1_w": jnp.ones((1, d_model), jnp.float32),
        "ln1_b": jnp.zeros((1, d_model), jnp.float32),
        "w1": sc * jax.random.normal(ks[7], (d_model, dim_feedforward), jnp.float32),
        "b1": sc * jax.random.normal(ks[8], (1, dim_feedforward), jnp.float32),
        "w2": sc * jax.random.normal(ks[9], (dim_feedforward, d_model), jnp.float32),
        "b2": jnp.zeros((1, d_model), jnp.float32),
        "ln2_w": jnp.ones((1, d_model), jnp.float32),
        "ln2_b": jnp.zeros((1, d_model), jnp.float32),
    }


if __name__ == "__main__":
    # Small but lane-dense shapes: D and F multiples of 128, S = sublane width.
    d_model, nhead, dim_feedforward = 128, 4, 1024

    key = jax.random.PRNGKey(0)
    k_data, k_p = jax.random.split(key, 2)
    params = _init_params(k_p, d_model, nhead, dim_feedforward)

    def check(B, S, with_pos):
        kx, kpos = jax.random.split(jax.random.fold_in(k_data, 1000 * B + S), 2)
        src = jax.random.normal(kx, (B, S, d_model), jnp.float32)
        pos = (0.1 * jax.random.normal(kpos, (B, S, d_model), jnp.float32)
               if with_pos else None)
        out = jax.block_until_ready(
            transformer_encoder_layer(src, params, pos, nhead=nhead))
        ref = _reference_jax(src, params, pos, nhead)
        assert out.shape == (B, S, d_model)
        err = jnp.max(jnp.abs(out - ref))
        assert jnp.allclose(out, ref, atol=5e-2, rtol=5e-2), f"max abs err {err}"

    check(2, 8, True)    # Bt=1, grid=2 (both v7x TCs busy), with pos_embed
    check(2, 8, False)   # pos_embed=None path (no dense zero tensor streamed)
    check(4, 8, True)    # Bt=2, grid=2: multiple batch elements per grid step

    print("KERNEL_OK")
</pallas_src>

<mosaic_0001>
module attributes {stable_mosaic.version = 11 : i64} {
  func.func @_encoder_layer_kernel(%arg0: i32, %arg1: memref<1x8x128xf32, #tpu.memory_space<vmem>>, %arg2: memref<1x8x128xf32, #tpu.memory_space<vmem>>, %arg3: memref<128x256xbf16, #tpu.memory_space<vmem>>, %arg4: memref<128x128xbf16, #tpu.memory_space<vmem>>, %arg5: memref<128x128xbf16, #tpu.memory_space<vmem>>, %arg6: memref<2x128x512xbf16, #tpu.memory_space<vmem>>, %arg7: memref<2x1x512xf32, #tpu.memory_space<vmem>>, %arg8: memref<2x512x128xbf16, #tpu.memory_space<vmem>>, %arg9: memref<9x128xf32, #tpu.memory_space<vmem>>, %arg10: memref<1x8x128xf32, #tpu.memory_space<vmem>>, %arg11: memref<8x128xf32, #tpu.memory_space<vmem>>) attributes {dimension_semantics = [#tpu.dimension_semantics<parallel>], iteration_bounds = array<i64: 2>, scalar_prefetch = 0 : i64, scratch_operands = 1 : i64, tpu.core_type = #tpu.core_type<tc>, window_params = [{transform_indices = @transform_0, window_bounds = array<i64: 1, 8, 128>}, {transform_indices = @transform_1, window_bounds = array<i64: 1, 8, 128>}, {pipeline_mode = #tpu.pipeline_mode<synchronous>, transform_indices = @transform_2, window_bounds = array<i64: 128, 256>}, {pipeline_mode = #tpu.pipeline_mode<synchronous>, transform_indices = @transform_3, window_bounds = array<i64: 128, 128>}, {pipeline_mode = #tpu.pipeline_mode<synchronous>, transform_indices = @transform_4, window_bounds = array<i64: 128, 128>}, {pipeline_mode = #tpu.pipeline_mode<synchronous>, transform_indices = @transform_5, window_bounds = array<i64: 2, 128, 512>}, {pipeline_mode = #tpu.pipeline_mode<synchronous>, transform_indices = @transform_6, window_bounds = array<i64: 2, 1, 512>}, {pipeline_mode = #tpu.pipeline_mode<synchronous>, transform_indices = @transform_7, window_bounds = array<i64: 2, 512, 128>}, {pipeline_mode = #tpu.pipeline_mode<synchronous>, transform_indices = @transform_8, window_bounds = array<i64: 9, 128>}, {transform_indices = @transform_9, window_bounds = array<i64: 1, 8, 128>}]} {
    %c0 = arith.constant 0 : index
    %c0_0 = arith.constant 0 : index
    %c0_1 = arith.constant 0 : index
    %0 = vector.load %arg1[%c0, %c0_0, %c0_1] : memref<1x8x128xf32, #tpu.memory_space<vmem>>, vector<1x8x128xf32>
    %1 = vector.shape_cast %0 : vector<1x8x128xf32> to vector<8x128xf32>
    %2 = arith.truncf %1 : vector<8x128xf32> to vector<8x128xbf16>
    %c0_2 = arith.constant 0 : index
    %c0_3 = arith.constant 0 : index
    %c0_4 = arith.constant 0 : index
    %3 = vector.load %arg2[%c0_2, %c0_3, %c0_4] : memref<1x8x128xf32, #tpu.memory_space<vmem>>, vector<1x8x128xf32>
    %4 = vector.shape_cast %3 : vector<1x8x128xf32> to vector<8x128xf32>
    %5 = arith.addf %1, %4 : vector<8x128xf32>
    %6 = arith.truncf %5 : vector<8x128xf32> to vector<8x128xbf16>
    %c0_5 = arith.constant 0 : index
    %c0_6 = arith.constant 0 : index
    %7 = vector.load %arg9[%c0_5, %c0_6] : memref<9x128xf32, #tpu.memory_space<vmem>>, vector<9x128xf32>
    %c0_7 = arith.constant 0 : index
    %c0_8 = arith.constant 0 : index
    %8 = vector.load %arg3[%c0_7, %c0_8] : memref<128x256xbf16, #tpu.memory_space<vmem>>, vector<128x256xbf16>
    %cst = arith.constant dense<0.000000e+00> : vector<8x256xf32>
    %9 = tpu.matmul %6, %8, %cst {dimension_numbers = #tpu.dot_dimension_numbers<[1], [0], [0], [1], [0, 0, 1, 1], [], []>} : vector<8x128xbf16>, vector<128x256xbf16>, vector<8x256xf32> -> vector<8x256xf32>
    %10 = vector.extract_strided_slice %9 {offsets = [0, 0], sizes = [8, 128], strides = [1, 1]} : vector<8x256xf32> to vector<8x128xf32>
    %11 = vector.extract_strided_slice %7 {offsets = [0, 0], sizes = [1, 128], strides = [1, 1]} : vector<9x128xf32> to vector<1x128xf32>
    %12 = vector.broadcast %11 : vector<1x128xf32> to vector<8x128xf32>
    %13 = arith.addf %10, %12 : vector<8x128xf32>
    %14 = vector.extract_strided_slice %9 {offsets = [0, 128], sizes = [8, 128], strides = [1, 1]} : vector<8x256xf32> to vector<8x128xf32>
    %15 = vector.extract_strided_slice %7 {offsets = [1, 0], sizes = [1, 128], strides = [1, 1]} : vector<9x128xf32> to vector<1x128xf32>
    %16 = vector.broadcast %15 : vector<1x128xf32> to vector<8x128xf32>
    %17 = arith.addf %14, %16 : vector<8x128xf32>
    %c0_9 = arith.constant 0 : index
    %c0_10 = arith.constant 0 : index
    %18 = vector.load %arg4[%c0_9, %c0_10] : memref<128x128xbf16, #tpu.memory_space<vmem>>, vector<128x128xbf16>
    %cst_11 = arith.constant dense<0.000000e+00> : vector<8x128xf32>
    %19 = tpu.matmul %2, %18, %cst_11 {dimension_numbers = #tpu.dot_dimension_numbers<[1], [0], [0], [1], [0, 0, 1, 1], [], []>} : vector<8x128xbf16>, vector<128x128xbf16>, vector<8x128xf32> -> vector<8x128xf32>
    %20 = vector.extract_strided_slice %7 {offsets = [2, 0], sizes = [1, 128], strides = [1, 1]} : vector<9x128xf32> to vector<1x128xf32>
    %21 = vector.broadcast %20 : vector<1x128xf32> to vector<8x128xf32>
    %22 = arith.addf %19, %21 : vector<8x128xf32>
    %23 = vector.extract_strided_slice %13 {offsets = [0, 0], sizes = [8, 32], strides = [1, 1]} : vector<8x128xf32> to vector<8x32xf32>
    %24 = vector.extract_strided_slice %13 {offsets = [0, 32], sizes = [8, 32], strides = [1, 1]} : vector<8x128xf32> to vector<8x32xf32>
    %25 = vector.extract_strided_slice %13 {offsets = [0, 64], sizes = [8, 32], strides = [1, 1]} : vector<8x128xf32> to vector<8x32xf32>
    %26 = vector.extract_strided_slice %13 {offsets = [0, 96], sizes = [8, 32], strides = [1, 1]} : vector<8x128xf32> to vector<8x32xf32>
    %27 = vector.shape_cast %23 : vector<8x32xf32> to vector<1x8x32xf32>
    %28 = vector.shape_cast %24 : vector<8x32xf32> to vector<1x8x32xf32>
    %29 = vector.shape_cast %25 : vector<8x32xf32> to vector<1x8x32xf32>
    %30 = vector.shape_cast %26 : vector<8x32xf32> to vector<1x8x32xf32>
    %31 = tpu.concatenate %27, %28, %29, %30 in 0 : vector<1x8x32xf32>, vector<1x8x32xf32>, vector<1x8x32xf32>, vector<1x8x32xf32> -> vector<4x8x32xf32>
    %32 = arith.truncf %31 : vector<4x8x32xf32> to vector<4x8x32xbf16>
    %33 = vector.extract_strided_slice %17 {offsets = [0, 0], sizes = [8, 32], strides = [1, 1]} : vector<8x128xf32> to vector<8x32xf32>
    %34 = vector.extract_strided_slice %17 {offsets = [0, 32], sizes = [8, 32], strides = [1, 1]} : vector<8x128xf32> to vector<8x32xf32>
    %35 = vector.extract_strided_slice %17 {offsets = [0, 64], sizes = [8, 32], strides = [1, 1]} : vector<8x128xf32> to vector<8x32xf32>
    %36 = vector.extract_strided_slice %17 {offsets = [0, 96], sizes = [8, 32], strides = [1, 1]} : vector<8x128xf32> to vector<8x32xf32>
    %37 = vector.shape_cast %33 : vector<8x32xf32> to vector<1x8x32xf32>
    %38 = vector.shape_cast %34 : vector<8x32xf32> to vector<1x8x32xf32>
    %39 = vector.shape_cast %35 : vector<8x32xf32> to vector<1x8x32xf32>
    %40 = vector.shape_cast %36 : vector<8x32xf32> to vector<1x8x32xf32>
    %41 = tpu.concatenate %37, %38, %39, %40 in 0 : vector<1x8x32xf32>, vector<1x8x32xf32>, vector<1x8x32xf32>, vector<1x8x32xf32> -> vector<4x8x32xf32>
    %42 = arith.truncf %41 : vector<4x8x32xf32> to vector<4x8x32xbf16>
    %43 = vector.extract_strided_slice %22 {offsets = [0, 0], sizes = [8, 32], strides = [1, 1]} : vector<8x128xf32> to vector<8x32xf32>
    %44 = vector.extract_strided_slice %22 {offsets = [0, 32], sizes = [8, 32], strides = [1, 1]} : vector<8x128xf32> to vector<8x32xf32>
    %45 = vector.extract_strided_slice %22 {offsets = [0, 64], sizes = [8, 32], strides = [1, 1]} : vector<8x128xf32> to vector<8x32xf32>
    %46 = vector.extract_strided_slice %22 {offsets = [0, 96], sizes = [8, 32], strides = [1, 1]} : vector<8x128xf32> to vector<8x32xf32>
    %47 = vector.shape_cast %43 : vector<8x32xf32> to vector<1x8x32xf32>
    %48 = vector.shape_cast %44 : vector<8x32xf32> to vector<1x8x32xf32>
    %49 = vector.shape_cast %45 : vector<8x32xf32> to vector<1x8x32xf32>
    %50 = vector.shape_cast %46 : vector<8x32xf32> to vector<1x8x32xf32>
    %51 = tpu.concatenate %47, %48, %49, %50 in 0 : vector<1x8x32xf32>, vector<1x8x32xf32>, vector<1x8x32xf32>, vector<1x8x32xf32> -> vector<4x8x32xf32>
    %52 = arith.truncf %51 : vector<4x8x32xf32> to vector<4x8x32xbf16>
    "tpu.trace_start"() <{level = 10 : i32, message = "gqe,gke->gqk"}> : () -> ()
    %cst_12 = arith.constant dense<0.000000e+00> : vector<4x8x8xf32>
    %53 = tpu.matmul %32, %42, %cst_12 {dimension_numbers = #tpu.dot_dimension_numbers<[2], [2], [1], [1], [0, 0, 0, 1, 1, 1], [0], [0]>} : vector<4x8x32xbf16>, vector<4x8x32xbf16>, vector<4x8x8xf32> -> vector<4x8x8xf32>
    "tpu.trace_stop"() : () -> ()
    %cst_13 = arith.constant dense<0xFF800000> : vector<4x8xf32>
    %54 = vector.multi_reduction <maximumf>, %53, %cst_13 [2] : vector<4x8x8xf32> to vector<4x8xf32>
    %55 = vector.shape_cast %54 : vector<4x8xf32> to vector<4x8x1xf32>
    %56 = vector.broadcast %55 : vector<4x8x1xf32> to vector<4x8x8xf32>
    %57 = arith.subf %53, %56 : vector<4x8x8xf32>
    %58 = math.exp %57 : vector<4x8x8xf32>
    %cst_14 = arith.constant dense<0.000000e+00> : vector<4x8xf32>
    %59 = vector.multi_reduction <add>, %58, %cst_14 [2] : vector<4x8x8xf32> to vector<4x8xf32>
    %60 = vector.shape_cast %59 : vector<4x8xf32> to vector<4x8x1xf32>
    %61 = tpu.reciprocal %60 {approx = true} : vector<4x8x1xf32> -> vector<4x8x1xf32>
    %62 = vector.broadcast %61 : vector<4x8x1xf32> to vector<4x8x8xf32>
    %63 = arith.mulf %58, %62 : vector<4x8x8xf32>
    %64 = arith.truncf %63 : vector<4x8x8xf32> to vector<4x8x8xbf16>
    "tpu.trace_start"() <{level = 10 : i32, message = "gqk,gke->gqe"}> : () -> ()
    %cst_15 = arith.constant dense<0.000000e+00> : vector<4x8x32xf32>
    %65 = tpu.matmul %64, %52, %cst_15 {dimension_numbers = #tpu.dot_dimension_numbers<[2], [1], [1], [2], [0, 0, 0, 1, 1, 2], [0], [0]>} : vector<4x8x8xbf16>, vector<4x8x32xbf16>, vector<4x8x32xf32> -> vector<4x8x32xf32>
    "tpu.trace_stop"() : () -> ()
    %66 = vector.extract_strided_slice %65 {offsets = [0, 0, 0], sizes = [1, 8, 32], strides = [1, 1, 1]} : vector<4x8x32xf32> to vector<1x8x32xf32>
    %67 = vector.shape_cast %66 : vector<1x8x32xf32> to vector<8x32xf32>
    %68 = vector.extract_strided_slice %65 {offsets = [1, 0, 0], sizes = [1, 8, 32], strides = [1, 1, 1]} : vector<4x8x32xf32> to vector<1x8x32xf32>
    %69 = vector.shape_cast %68 : vector<1x8x32xf32> to vector<8x32xf32>
    %70 = vector.extract_strided_slice %65 {offsets = [2, 0, 0], sizes = [1, 8, 32], strides = [1, 1, 1]} : vector<4x8x32xf32> to vector<1x8x32xf32>
    %71 = vector.shape_cast %70 : vector<1x8x32xf32> to vector<8x32xf32>
    %72 = vector.extract_strided_slice %65 {offsets = [3, 0, 0], sizes = [1, 8, 32], strides = [1, 1, 1]} : vector<4x8x32xf32> to vector<1x8x32xf32>
    %73 = vector.shape_cast %72 : vector<1x8x32xf32> to vector<8x32xf32>
    %74 = tpu.concatenate %67, %69, %71, %73 in 1 : vector<8x32xf32>, vector<8x32xf32>, vector<8x32xf32>, vector<8x32xf32> -> vector<8x128xf32>
    %75 = arith.truncf %74 : vector<8x128xf32> to vector<8x128xbf16>
    %c0_16 = arith.constant 0 : index
    %c0_17 = arith.constant 0 : index
    %76 = vector.load %arg5[%c0_16, %c0_17] : memref<128x128xbf16, #tpu.memory_space<vmem>>, vector<128x128xbf16>
    %cst_18 = arith.constant dense<0.000000e+00> : vector<8x128xf32>
    %77 = tpu.matmul %75, %76, %cst_18 {dimension_numbers = #tpu.dot_dimension_numbers<[1], [0], [0], [1], [0, 0, 1, 1], [], []>} : vector<8x128xbf16>, vector<128x128xbf16>, vector<8x128xf32> -> vector<8x128xf32>
    %78 = vector.extract_strided_slice %7 {offsets = [3, 0], sizes = [1, 128], strides = [1, 1]} : vector<9x128xf32> to vector<1x128xf32>
    %79 = vector.broadcast %78 : vector<1x128xf32> to vector<8x128xf32>
    %80 = arith.addf %77, %79 : vector<8x128xf32>
    %81 = arith.addf %1, %80 : vector<8x128xf32>
    %82 = vector.extract_strided_slice %7 {offsets = [5, 0], sizes = [1, 128], strides = [1, 1]} : vector<9x128xf32> to vector<1x128xf32>
    %83 = vector.extract_strided_slice %7 {offsets = [6, 0], sizes = [1, 128], strides = [1, 1]} : vector<9x128xf32> to vector<1x128xf32>
    %cst_19 = arith.constant dense<0.000000e+00> : vector<8xf32>
    %84 = vector.multi_reduction <add>, %81, %cst_19 [1] : vector<8x128xf32> to vector<8xf32>
    %85 = vector.shape_cast %84 : vector<8xf32> to vector<8x1xf32>
    %cst_20 = arith.constant 1.280000e+02 : f32
    %86 = vector.broadcast %cst_20 : f32 to vector<8x1xf32>
    %87 = arith.divf %85, %86 : vector<8x1xf32>
    %88 = vector.broadcast %87 : vector<8x1xf32> to vector<8x128xf32>
    %89 = arith.subf %81, %88 : vector<8x128xf32>
    %90 = arith.mulf %89, %89 : vector<8x128xf32>
    %cst_21 = arith.constant dense<0.000000e+00> : vector<8xf32>
    %91 = vector.multi_reduction <add>, %90, %cst_21 [1] : vector<8x128xf32> to vector<8xf32>
    %92 = vector.shape_cast %91 : vector<8xf32> to vector<8x1xf32>
    %cst_22 = arith.constant 1.280000e+02 : f32
    %93 = vector.broadcast %cst_22 : f32 to vector<8x1xf32>
    %94 = arith.divf %92, %93 : vector<8x1xf32>
    %95 = vector.broadcast %87 : vector<8x1xf32> to vector<8x128xf32>
    %96 = arith.subf %81, %95 : vector<8x128xf32>
    %cst_23 = arith.constant 9.99999974E-6 : f32
    %97 = vector.broadcast %cst_23 : f32 to vector<8x1xf32>
    %98 = arith.addf %94, %97 : vector<8x1xf32>
    %99 = math.rsqrt %98 : vector<8x1xf32>
    %100 = vector.broadcast %99 : vector<8x1xf32> to vector<8x128xf32>
    %101 = arith.mulf %96, %100 : vector<8x128xf32>
    %102 = vector.broadcast %82 : vector<1x128xf32> to vector<8x128xf32>
    %103 = arith.mulf %101, %102 : vector<8x128xf32>
    %104 = vector.broadcast %83 : vector<1x128xf32> to vector<8x128xf32>
    %105 = arith.addf %103, %104 : vector<8x128xf32>
    %106 = arith.truncf %105 : vector<8x128xf32> to vector<8x128xbf16>
    %cst_24 = arith.constant 0.000000e+00 : f32
    %107 = vector.broadcast %cst_24 : f32 to vector<8x128xf32>
    %c0_25 = arith.constant 0 : index
    %c0_26 = arith.constant 0 : index
    %108 = vector.load %arg11[%c0_25, %c0_26] : memref<8x128xf32, #tpu.memory_space<vmem>>, vector<8x128xf32>
    tpu.vector_store %arg11[%c0_25, %c0_26], %107 {strides = array<i32>} : memref<8x128xf32, #tpu.memory_space<vmem>>, vector<8x128xf32>,
    %c0_i32 = arith.constant 0 : i32
    %109 = arith.index_cast %c0_i32 : i32 to index
    %c0_27 = arith.constant 0 : index
    %c0_28 = arith.constant 0 : index
    %110 = vector.load %arg6[%109, %c0_27, %c0_28] : memref<2x128x512xbf16, #tpu.memory_space<vmem>>, vector<1x128x512xbf16>
    %111 = vector.shape_cast %110 : vector<1x128x512xbf16> to vector<128x512xbf16>
    %cst_29 = arith.constant dense<0.000000e+00> : vector<8x512xf32>
    %112 = tpu.matmul %106, %111, %cst_29 {dimension_numbers = #tpu.dot_dimension_numbers<[1], [0], [0], [1], [0, 0, 1, 1], [], []>} : vector<8x128xbf16>, vector<128x512xbf16>, vector<8x512xf32> -> vector<8x512xf32>
    %113 = arith.index_cast %c0_i32 : i32 to index
    %c0_30 = arith.constant 0 : index
    %c0_31 = arith.constant 0 : index
    %114 = vector.load %arg7[%113, %c0_30, %c0_31] : memref<2x1x512xf32, #tpu.memory_space<vmem>>, vector<1x1x512xf32>
    %115 = vector.shape_cast %114 : vector<1x1x512xf32> to vector<1x512xf32>
    %116 = vector.broadcast %115 : vector<1x512xf32> to vector<8x512xf32>
    %117 = arith.addf %112, %116 : vector<8x512xf32>
    %cst_32 = arith.constant 0.000000e+00 : f32
    %118 = vector.broadcast %cst_32 : f32 to vector<8x512xf32>
    %119 = arith.maximumf %117, %118 : vector<8x512xf32>
    %c0_33 = arith.constant 0 : index
    %c0_34 = arith.constant 0 : index
    %120 = vector.load %arg11[%c0_33, %c0_34] : memref<8x128xf32, #tpu.memory_space<vmem>>, vector<8x128xf32>
    %121 = arith.truncf %119 : vector<8x512xf32> to vector<8x512xbf16>
    %122 = arith.index_cast %c0_i32 : i32 to index
    %c0_35 = arith.constant 0 : index
    %c0_36 = arith.constant 0 : index
    %123 = vector.load %arg8[%122, %c0_35, %c0_36] : memref<2x512x128xbf16, #tpu.memory_space<vmem>>, vector<1x512x128xbf16>
    %124 = vector.shape_cast %123 : vector<1x512x128xbf16> to vector<512x128xbf16>
    %cst_37 = arith.constant dense<0.000000e+00> : vector<8x128xf32>
    %125 = tpu.matmul %121, %124, %cst_37 {dimension_numbers = #tpu.dot_dimension_numbers<[1], [0], [0], [1], [0, 0, 1, 1], [], []>} : vector<8x512xbf16>, vector<512x128xbf16>, vector<8x128xf32> -> vector<8x128xf32>
    %126 = arith.addf %120, %125 : vector<8x128xf32>
    %c0_38 = arith.constant 0 : index
    %c0_39 = arith.constant 0 : index
    %127 = vector.load %arg11[%c0_38, %c0_39] : memref<8x128xf32, #tpu.memory_space<vmem>>, vector<8x128xf32>
    tpu.vector_store %arg11[%c0_38, %c0_39], %126 {strides = array<i32>} : memref<8x128xf32, #tpu.memory_space<vmem>>, vector<8x128xf32>,
    %c1_i32 = arith.constant 1 : i32
    %128 = arith.index_cast %c1_i32 : i32 to index
    %c0_40 = arith.constant 0 : index
    %c0_41 = arith.constant 0 : index
    %129 = vector.load %arg6[%128, %c0_40, %c0_41] : memref<2x128x512xbf16, #tpu.memory_space<vmem>>, vector<1x128x512xbf16>
    %130 = vector.shape_cast %129 : vector<1x128x512xbf16> to vector<128x512xbf16>
    %cst_42 = arith.constant dense<0.000000e+00> : vector<8x512xf32>
    %131 = tpu.matmul %106, %130, %cst_42 {dimension_numbers = #tpu.dot_dimension_numbers<[1], [0], [0], [1], [0, 0, 1, 1], [], []>} : vector<8x128xbf16>, vector<128x512xbf16>, vector<8x512xf32> -> vector<8x512xf32>
    %132 = arith.index_cast %c1_i32 : i32 to index
    %c0_43 = arith.constant 0 : index
    %c0_44 = arith.constant 0 : index
    %133 = vector.load %arg7[%132, %c0_43, %c0_44] : memref<2x1x512xf32, #tpu.memory_space<vmem>>, vector<1x1x512xf32>
    %134 = vector.shape_cast %133 : vector<1x1x512xf32> to vector<1x512xf32>
    %135 = vector.broadcast %134 : vector<1x512xf32> to vector<8x512xf32>
    %136 = arith.addf %131, %135 : vector<8x512xf32>
    %cst_45 = arith.constant 0.000000e+00 : f32
    %137 = vector.broadcast %cst_45 : f32 to vector<8x512xf32>
    %138 = arith.maximumf %136, %137 : vector<8x512xf32>
    %c0_46 = arith.constant 0 : index
    %c0_47 = arith.constant 0 : index
    %139 = vector.load %arg11[%c0_46, %c0_47] : memref<8x128xf32, #tpu.memory_space<vmem>>, vector<8x128xf32>
    %140 = arith.truncf %138 : vector<8x512xf32> to vector<8x512xbf16>
    %141 = arith.index_cast %c1_i32 : i32 to index
    %c0_48 = arith.constant 0 : index
    %c0_49 = arith.constant 0 : index
    %142 = vector.load %arg8[%141, %c0_48, %c0_49] : memref<2x512x128xbf16, #tpu.memory_space<vmem>>, vector<1x512x128xbf16>
    %143 = vector.shape_cast %142 : vector<1x512x128xbf16> to vector<512x128xbf16>
    %cst_50 = arith.constant dense<0.000000e+00> : vector<8x128xf32>
    %144 = tpu.matmul %140, %143, %cst_50 {dimension_numbers = #tpu.dot_dimension_numbers<[1], [0], [0], [1], [0, 0, 1, 1], [], []>} : vector<8x512xbf16>, vector<512x128xbf16>, vector<8x128xf32> -> vector<8x128xf32>
    %145 = arith.addf %139, %144 : vector<8x128xf32>
    %c0_51 = arith.constant 0 : index
    %c0_52 = arith.constant 0 : index
    %146 = vector.load %arg11[%c0_51, %c0_52] : memref<8x128xf32, #tpu.memory_space<vmem>>, vector<8x128xf32>
    tpu.vector_store %arg11[%c0_51, %c0_52], %145 {strides = array<i32>} : memref<8x128xf32, #tpu.memory_space<vmem>>, vector<8x128xf32>,
    %c2_i32 = arith.constant 2 : i32
    %c0_53 = arith.constant 0 : index
    %c0_54 = arith.constant 0 : index
    %147 = vector.load %arg11[%c0_53, %c0_54] : memref<8x128xf32, #tpu.memory_space<vmem>>, vector<8x128xf32>
    %148 = vector.extract_strided_slice %7 {offsets = [4, 0], sizes = [1, 128], strides = [1, 1]} : vector<9x128xf32> to vector<1x128xf32>
    %149 = vector.broadcast %148 : vector<1x128xf32> to vector<8x128xf32>
    %150 = arith.addf %147, %149 : vector<8x128xf32>
    %151 = arith.addf %105, %150 : vector<8x128xf32>
    %152 = vector.extract_strided_slice %7 {offsets = [7, 0], sizes = [1, 128], strides = [1, 1]} : vector<9x128xf32> to vector<1x128xf32>
    %153 = vector.extract_strided_slice %7 {offsets = [8, 0], sizes = [1, 128], strides = [1, 1]} : vector<9x128xf32> to vector<1x128xf32>
    %cst_55 = arith.constant dense<0.000000e+00> : vector<8xf32>
    %154 = vector.multi_reduction <add>, %151, %cst_55 [1] : vector<8x128xf32> to vector<8xf32>
    %155 = vector.shape_cast %154 : vector<8xf32> to vector<8x1xf32>
    %cst_56 = arith.constant 1.280000e+02 : f32
    %156 = vector.broadcast %cst_56 : f32 to vector<8x1xf32>
    %157 = arith.divf %155, %156 : vector<8x1xf32>
    %158 = vector.broadcast %157 : vector<8x1xf32> to vector<8x128xf32>
    %159 = arith.subf %151, %158 : vector<8x128xf32>
    %160 = arith.mulf %159, %159 : vector<8x128xf32>
    %cst_57 = arith.constant dense<0.000000e+00> : vector<8xf32>
    %161 = vector.multi_reduction <add>, %160, %cst_57 [1] : vector<8x128xf32> to vector<8xf32>
    %162 = vector.shape_cast %161 : vector<8xf32> to vector<8x1xf32>
    %cst_58 = arith.constant 1.280000e+02 : f32
    %163 = vector.broadcast %cst_58 : f32 to vector<8x1xf32>
    %164 = arith.divf %162, %163 : vector<8x1xf32>
    %165 = vector.broadcast %157 : vector<8x1xf32> to vector<8x128xf32>
    %166 = arith.subf %151, %165 : vector<8x128xf32>
    %cst_59 = arith.constant 9.99999974E-6 : f32
    %167 = vector.broadcast %cst_59 : f32 to vector<8x1xf32>
    %168 = arith.addf %164, %167 : vector<8x1xf32>
    %169 = math.rsqrt %168 : vector<8x1xf32>
    %170 = vector.broadcast %169 : vector<8x1xf32> to vector<8x128xf32>
    %171 = arith.mulf %166, %170 : vector<8x128xf32>
    %172 = vector.broadcast %152 : vector<1x128xf32> to vector<8x128xf32>
    %173 = arith.mulf %171, %172 : vector<8x128xf32>
    %174 = vector.broadcast %153 : vector<1x128xf32> to vector<8x128xf32>
    %175 = arith.addf %173, %174 : vector<8x128xf32>
    %176 = vector.shape_cast %175 : vector<8x128xf32> to vector<1x8x128xf32>
    %c0_60 = arith.constant 0 : index
    %c0_61 = arith.constant 0 : index
    %c0_62 = arith.constant 0 : index
    %177 = vector.load %arg10[%c0_60, %c0_61, %c0_62] : memref<1x8x128xf32, #tpu.memory_space<vmem>>, vector<1x8x128xf32>
    tpu.vector_store %arg10[%c0_60, %c0_61, %c0_62], %176 {strides = array<i32>} : memref<1x8x128xf32, #tpu.memory_space<vmem>>, vector<1x8x128xf32>,
    return
  }
  func.func @transform_0(%arg0: i32) -> (i32, i32, i32) {
    %c0_i32 = arith.constant 0 : i32
    %c0_i32_0 = arith.constant 0 : i32
    %c0_i32_1 = arith.constant 0 : i32
    return %arg0, %c0_i32, %c0_i32_0 : i32, i32, i32
  }
  func.func @transform_1(%arg0: i32) -> (i32, i32, i32) {
    %c0_i32 = arith.constant 0 : i32
    %c0_i32_0 = arith.constant 0 : i32
    %c0_i32_1 = arith.constant 0 : i32
    return %arg0, %c0_i32, %c0_i32_0 : i32, i32, i32
  }
  func.func @transform_2(%arg0: i32) -> (i32, i32) {
    %c0_i32 = arith.constant 0 : i32
    %c0_i32_0 = arith.constant 0 : i32
    %c0_i32_1 = arith.constant 0 : i32
    return %c0_i32, %c0_i32_0 : i32, i32
  }
  func.func @transform_3(%arg0: i32) -> (i32, i32) {
    %c0_i32 = arith.constant 0 : i32
    %c0_i32_0 = arith.constant 0 : i32
    %c0_i32_1 = arith.constant 0 : i32
    return %c0_i32, %c0_i32_0 : i32, i32
  }
  func.func @transform_4(%arg0: i32) -> (i32, i32) {
    %c0_i32 = arith.constant 0 : i32
    %c0_i32_0 = arith.constant 0 : i32
    %c0_i32_1 = arith.constant 0 : i32
    return %c0_i32, %c0_i32_0 : i32, i32
  }
  func.func @transform_5(%arg0: i32) -> (i32, i32, i32) {
    %c0_i32 = arith.constant 0 : i32
    %c0_i32_0 = arith.constant 0 : i32
    %c0_i32_1 = arith.constant 0 : i32
    %c0_i32_2 = arith.constant 0 : i32
    return %c0_i32, %c0_i32_0, %c0_i32_1 : i32, i32, i32
  }
  func.func @transform_6(%arg0: i32) -> (i32, i32, i32) {
    %c0_i32 = arith.constant 0 : i32
    %c0_i32_0 = arith.constant 0 : i32
    %c0_i32_1 = arith.constant 0 : i32
    %c0_i32_2 = arith.constant 0 : i32
    return %c0_i32, %c0_i32_0, %c0_i32_1 : i32, i32, i32
  }
  func.func @transform_7(%arg0: i32) -> (i32, i32, i32) {
    %c0_i32 = arith.constant 0 : i32
    %c0_i32_0 = arith.constant 0 : i32
    %c0_i32_1 = arith.constant 0 : i32
    %c0_i32_2 = arith.constant 0 : i32
    return %c0_i32, %c0_i32_0, %c0_i32_1 : i32, i32, i32
  }
  func.func @transform_8(%arg0: i32) -> (i32, i32) {
    %c0_i32 = arith.constant 0 : i32
    %c0_i32_0 = arith.constant 0 : i32
    %c0_i32_1 = arith.constant 0 : i32
    return %c0_i32, %c0_i32_0 : i32, i32
  }
  func.func @transform_9(%arg0: i32) -> (i32, i32, i32) {
    %c0_i32 = arith.constant 0 : i32
    %c0_i32_0 = arith.constant 0 : i32
    %c0_i32_1 = arith.constant 0 : i32
    return %arg0, %c0_i32, %c0_i32_0 : i32, i32, i32
  }
}

</mosaic_0001>

<llo_original>
// kernel: tpu_custom_call.1
$region0: #{tpu_custom_call.1}
  #allocation0 [shape = 'u32[]', space=smem, size = 0x4, offset = 0x4, fixed_abs, tag = 'smem constant byte address 0x4 - core index']
  #allocation1 [shape = 'u32[144,128]{1,0:T(1,128)}', space=vmem, size = 0x12000, scoped, tag = 'internal scratch']
  #allocation2 [shape = 'f32[8,128]{1,0:T(8,128)}', space=vmem, size = 0x1000, scoped, tag = 'scratch operand']
  %s0 = inlined_call_operand.hbm [shape: f32[2,8,128], index: 0, kind: input, shape index: {}]
  %s1 = inlined_call_operand.hbm [shape: f32[2,8,128], index: 1, kind: input, shape index: {}]
  %s2 = inlined_call_operand.hbm [shape: bf16[128,256], index: 2, kind: input, shape index: {}]
  %s3 = inlined_call_operand.hbm [shape: bf16[128,128], index: 3, kind: input, shape index: {}]
  %s4 = inlined_call_operand.hbm [shape: bf16[128,128], index: 4, kind: input, shape index: {}]
  %s5 = inlined_call_operand.hbm [shape: bf16[2,128,512], index: 5, kind: input, shape index: {}]
  %s6 = inlined_call_operand.vmem [shape: f32[2,1,512], index: 6, kind: input, shape index: {}]
  %s7 = inlined_call_operand.hbm [shape: bf16[2,512,128], index: 7, kind: input, shape index: {}]
  %s8 = inlined_call_operand.vmem [shape: f32[9,128], index: 8, kind: input, shape index: {}]
  %s9 = inlined_call_operand.hbm [shape: f32[2,8,128], index: 9, kind: output, shape index: {}]
  %s10 = sld [smem:[#allocation0]]
  $region97: #{tpu_custom_call.1} parent=0
    _
  %s12 = ssub.s32 1, %s10
  %s13 = scalar_select 0, %s12, %s10
  $region1: #{tpu_custom_call.1} parent=0
    #allocation3 [shape = 'u8[8192]{0}', space=vmem, size = 0x2000, scoped, tag = 'input window, operand 0']
    #allocation4 [shape = 's32[2]{0}', space=sflag, size = 0x8, scoped, tag = 'scoped memory for tpu_custom_call.1']
    #allocation5 [shape = 's32[2]{0}', space=sflag, size = 0x8, scoped, tag = 'scoped memory for tpu_custom_call.1']
    #allocation6 [shape = 'u8[8192]{0}', space=vmem, size = 0x2000, scoped, tag = 'input window, operand 1']
    #allocation7 [shape = 's32[2]{0}', space=sflag, size = 0x8, scoped, tag = 'scoped memory for tpu_custom_call.1']
    #allocation8 [shape = 'u8[65536]{0}', space=vmem, size = 0x10000, scoped, tag = 'input window, operand 2, single buffered']
    #allocation9 [shape = 'u8[32768]{0}', space=vmem, size = 0x8000, scoped, tag = 'input window, operand 3, single buffered']
    #allocation10 [shape = 's32[1]{0}', space=sflag, size = 0x4, scoped, tag = 'scoped memory for tpu_custom_call.1']
    #allocation11 [shape = 'u8[32768]{0}', space=vmem, size = 0x8000, scoped, tag = 'input window, operand 4, single buffered']
    #allocation12 [shape = 'u8[262144]{0}', space=vmem, size = 0x40000, scoped, tag = 'input window, operand 5, single buffered']
    #allocation13 [shape = 's32[1]{0}', space=sflag, size = 0x4, scoped, tag = 'scoped memory for tpu_custom_call.1']
    #allocation14 [shape = 'u8[262144]{0}', space=vmem, size = 0x40000, scoped, tag = 'input window, operand 7, single buffered']
    #allocation15 [shape = 'u8[8192]{0}', space=vmem, size = 0x2000, scoped, tag = 'output window, operand 0']
    %14 = vsyncpa [#allocation4], 0
    %s15 = scalar_lea.sflag [#allocation4], 1
    %16 = vsyncpa %s15, 0
    %17 = vsyncpa [#allocation7], 0
    %s18 = scalar_lea.sflag [#allocation7], 1
    %19 = vsyncpa %s18, 0
    %20 = vsyncpa [#allocation10], 0
    %21 = vsyncpa [#allocation13], 0
    %22 = vsyncpa [#allocation5], 0
    %s23 = scalar_lea.sflag [#allocation5], 1
    %24 = vsyncpa %s23, 0
    loop: start=0, step=1, limit=4
    $region2: #{tpu_custom_call.1} parent=1 // loop_pre_header
      _
    $region3: #{tpu_custom_call.1} parent=1 // loop_header
      %s26 = sphi 0, %s30
      %p27 = scmp.ge.s32.totalorder %s26, 4
      %s36 = sphi 0, %s38
      %s39 = sphi 0, %s36
      %s40 = sphi 0, %s39
      %s56 = sphi 0, %s40
      %s62 = sphi 0, %s64
      %s65 = sphi 0, %s62
      %s66 = sphi 0, %s65
      %s82 = sphi 0, %s66
      %s86 = sphi 0, %s86
      %s88 = sphi 0, %s86
      %s89 = sphi 0, %s88
      %s103 = sphi 0, %s89
      %s107 = sphi 0, %s107
      %s109 = sphi 0, %s107
      %s110 = sphi 0, %s109
      %s124 = sphi 0, %s110
      %s128 = sphi 0, %s128
      %s130 = sphi 0, %s128
      %s131 = sphi 0, %s130
      %s145 = sphi 0, %s131
      %s149 = sphi 0, %s149
      %s151 = sphi 0, %s149
      %s152 = sphi 0, %s151
      %s166 = sphi 0, %s152
      %s170 = sphi 0, %s170
      %s172 = sphi 0, %s170
      %s173 = sphi 0, %s172
      %s187 = sphi 0, %s173
      %s191 = sphi 0, %s191
      %s193 = sphi 0, %s191
      %s194 = sphi 0, %s193
      %s208 = sphi 0, %s194
      %s212 = sphi 0, %s212
      %s214 = sphi 0, %s212
      %s215 = sphi 0, %s214
      %s229 = sphi 0, %s215
      %s235 = sphi 0, %s237
      %s238 = sphi 0, %s235
      %s239 = sphi 0, %s238
      %s255 = sphi 0, %s239
    $region4: #{tpu_custom_call.1} parent=1 // loop_header_branch
      %29 = sbr.rel (%p27) target = $region8
    $region5: #{tpu_custom_call.1} parent=1 // loop_body
      %s31 = ssub.s32 %s26, 1
      %s32 = ssub.s32 %s26, 2
      %s33 = sadd.s32 %s26, 1
      %s34 = ssub.s32 %s26, %s33
      %p35 = scmp.eq.s32.totalorder %s34, 0
      %s37 = sadd.s32 %s36, 1
      %s38 = scalar_select %p35, %s36, %s37
      %p41 = pneg %p35
      %p42 = scmp.eq.s32.totalorder %s26, 1
      %p43 = por %p41, %p42
      %p44 = scmp.ne.s32.totalorder %s36, %s39
      %p45 = scmp.eq.s32.totalorder %s26, 0
      %p46 = por %p44, %p45
      %p47 = scmp.ne.s32.totalorder %s36, %s39
      %p48 = scmp.eq.s32.totalorder %s31, 1
      %p49 = por %p47, %p48
      %p50 = scmp.ne.s32.totalorder %s39, %s40
      %p51 = scmp.eq.s32.totalorder %s31, 0
      %p52 = por %p50, %p51
      %p53 = scmp.ne.s32.totalorder %s39, %s40
      %p54 = scmp.eq.s32.totalorder %s32, 1
      %p55 = por %p53, %p54
      %p57 = scmp.ne.s32.totalorder %s40, %s56
      %p58 = scmp.eq.s32.totalorder %s32, 0
      %p59 = por %p57, %p58
      %s60 = ssub.s32 %s26, %s33
      %p61 = scmp.eq.s32.totalorder %s60, 0
      %s63 = sadd.s32 %s62, 1
      %s64 = scalar_select %p61, %s62, %s63
      %p67 = pneg %p61
      %p68 = scmp.eq.s32.totalorder %s26, 1
      %p69 = por %p67, %p68
      %p70 = scmp.ne.s32.totalorder %s62, %s65
      %p71 = scmp.eq.s32.totalorder %s26, 0
      %p72 = por %p70, %p71
      %p73 = scmp.ne.s32.totalorder %s62, %s65
      %p74 = scmp.eq.s32.totalorder %s31, 1
      %p75 = por %p73, %p74
      %p76 = scmp.ne.s32.totalorder %s65, %s66
      %p77 = scmp.eq.s32.totalorder %s31, 0
      %p78 = por %p76, %p77
      %p79 = scmp.ne.s32.totalorder %s65, %s66
      %p80 = scmp.eq.s32.totalorder %s32, 1
      %p81 = por %p79, %p80
      %p83 = scmp.ne.s32.totalorder %s66, %s82
      %p84 = scmp.eq.s32.totalorder %s32, 0
      %p85 = por %p83, %p84
      %s87 = sadd.s32 %s86, 1
      %p90 = scmp.eq.s32.totalorder %s26, 1
      %p91 = scmp.ne.s32.totalorder %s86, %s88
      %p92 = scmp.eq.s32.totalorder %s26, 0
      %p93 = por %p91, %p92
      %p94 = scmp.ne.s32.totalorder %s86, %s88
      %p95 = scmp.eq.s32.totalorder %s31, 1
      %p96 = por %p94, %p95
      %p97 = scmp.ne.s32.totalorder %s88, %s89
      %p98 = scmp.eq.s32.totalorder %s31, 0
      %p99 = por %p97, %p98
      %p100 = scmp.ne.s32.totalorder %s88, %s89
      %p101 = scmp.eq.s32.totalorder %s32, 1
      %p102 = por %p100, %p101
      %p104 = scmp.ne.s32.totalorder %s89, %s103
      %p105 = scmp.eq.s32.totalorder %s32, 0
      %p106 = por %p104, %p105
      %s108 = sadd.s32 %s107, 1
      %p111 = scmp.eq.s32.totalorder %s26, 1
      %p112 = scmp.ne.s32.totalorder %s107, %s109
      %p113 = scmp.eq.s32.totalorder %s26, 0
      %p114 = por %p112, %p113
      %p115 = scmp.ne.s32.totalorder %s107, %s109
      %p116 = scmp.eq.s32.totalorder %s31, 1
      %p117 = por %p115, %p116
      %p118 = scmp.ne.s32.totalorder %s109, %s110
      %p119 = scmp.eq.s32.totalorder %s31, 0
      %p120 = por %p118, %p119
      %p121 = scmp.ne.s32.totalorder %s109, %s110
      %p122 = scmp.eq.s32.totalorder %s32, 1
      %p123 = por %p121, %p122
      %p125 = scmp.ne.s32.totalorder %s110, %s124
      %p126 = scmp.eq.s32.totalorder %s32, 0
      %p127 = por %p125, %p126
      %s129 = sadd.s32 %s128, 1
      %p132 = scmp.eq.s32.totalorder %s26, 1
      %p133 = scmp.ne.s32.totalorder %s128, %s130
      %p134 = scmp.eq.s32.totalorder %s26, 0
      %p135 = por %p133, %p134
      %p136 = scmp.ne.s32.totalorder %s128, %s130
      %p137 = scmp.eq.s32.totalorder %s31, 1
      %p138 = por %p136, %p137
      %p139 = scmp.ne.s32.totalorder %s130, %s131
      %p140 = scmp.eq.s32.totalorder %s31, 0
      %p141 = por %p139, %p140
      %p142 = scmp.ne.s32.totalorder %s130, %s131
      %p143 = scmp.eq.s32.totalorder %s32, 1
      %p144 = por %p142, %p143
      %p146 = scmp.ne.s32.totalorder %s131, %s145
      %p147 = scmp.eq.s32.totalorder %s32, 0
      %p148 = por %p146, %p147
      %s150 = sadd.s32 %s149, 1
      %p153 = scmp.eq.s32.totalorder %s26, 1
      %p154 = scmp.ne.s32.totalorder %s149, %s151
      %p155 = scmp.eq.s32.totalorder %s26, 0
      %p156 = por %p154, %p155
      %p157 = scmp.ne.s32.totalorder %s149, %s151
      %p158 = scmp.eq.s32.totalorder %s31, 1
      %p159 = por %p157, %p158
      %p160 = scmp.ne.s32.totalorder %s151, %s152
      %p161 = scmp.eq.s32.totalorder %s31, 0
      %p162 = por %p160, %p161
      %p163 = scmp.ne.s32.totalorder %s151, %s152
      %p164 = scmp.eq.s32.totalorder %s32, 1
      %p165 = por %p163, %p164
      %p167 = scmp.ne.s32.totalorder %s152, %s166
      %p168 = scmp.eq.s32.totalorder %s32, 0
      %p169 = por %p167, %p168
      %s171 = sadd.s32 %s170, 1
      %p174 = scmp.eq.s32.totalorder %s26, 1
      %p175 = scmp.ne.s32.totalorder %s170, %s172
      %p176 = scmp.eq.s32.totalorder %s26, 0
      %p177 = por %p175, %p176
      %p178 = scmp.ne.s32.totalorder %s170, %s172
      %p179 = scmp.eq.s32.totalorder %s31, 1
      %p180 = por %p178, %p179
      %p181 = scmp.ne.s32.totalorder %s172, %s173
      %p182 = scmp.eq.s32.totalorder %s31, 0
      %p183 = por %p181, %p182
      %p184 = scmp.ne.s32.totalorder %s172, %s173
      %p185 = scmp.eq.s32.totalorder %s32, 1
      %p186 = por %p184, %p185
      %p188 = scmp.ne.s32.totalorder %s173, %s187
      %p189 = scmp.eq.s32.totalorder %s32, 0
      %p190 = por %p188, %p189
      %s192 = sadd.s32 %s191, 1
      %p195 = scmp.eq.s32.totalorder %s26, 1
      %p196 = scmp.ne.s32.totalorder %s191, %s193
      %p197 = scmp.eq.s32.totalorder %s26, 0
      %p198 = por %p196, %p197
      %p199 = scmp.ne.s32.totalorder %s191, %s193
      %p200 = scmp.eq.s32.totalorder %s31, 1
      %p201 = por %p199, %p200
      %p202 = scmp.ne.s32.totalorder %s193, %s194
      %p203 = scmp.eq.s32.totalorder %s31, 0
      %p204 = por %p202, %p203
      %p205 = scmp.ne.s32.totalorder %s193, %s194
      %p206 = scmp.eq.s32.totalorder %s32, 1
      %p207 = por %p205, %p206
      %p209 = scmp.ne.s32.totalorder %s194, %s208
      %p210 = scmp.eq.s32.totalorder %s32, 0
      %p211 = por %p209, %p210
      %s213 = sadd.s32 %s212, 1
      %p216 = scmp.eq.s32.totalorder %s26, 1
      %p217 = scmp.ne.s32.totalorder %s212, %s214
      %p218 = scmp.eq.s32.totalorder %s26, 0
      %p219 = por %p217, %p218
      %p220 = scmp.ne.s32.totalorder %s212, %s214
      %p221 = scmp.eq.s32.totalorder %s31, 1
      %p222 = por %p220, %p221
      %p223 = scmp.ne.s32.totalorder %s214, %s215
      %p224 = scmp.eq.s32.totalorder %s31, 0
      %p225 = por %p223, %p224
      %p226 = scmp.ne.s32.totalorder %s214, %s215
      %p227 = scmp.eq.s32.totalorder %s32, 1
      %p228 = por %p226, %p227
      %p230 = scmp.ne.s32.totalorder %s215, %s229
      %p231 = scmp.eq.s32.totalorder %s32, 0
      %p232 = por %p230, %p231
      %s233 = ssub.s32 %s26, %s33
      %p234 = scmp.eq.s32.totalorder %s233, 0
      %s236 = sadd.s32 %s235, 1
      %s237 = scalar_select %p234, %s235, %s236
      %p240 = pneg %p234
      %p241 = scmp.eq.s32.totalorder %s26, 1
      %p242 = por %p240, %p241
      %p243 = scmp.ne.s32.totalorder %s235, %s238
      %p244 = scmp.eq.s32.totalorder %s26, 0
      %p245 = por %p243, %p244
      %p246 = scmp.ne.s32.totalorder %s235, %s238
      %p247 = scmp.eq.s32.totalorder %s31, 1
      %p248 = por %p246, %p247
      %p249 = scmp.ne.s32.totalorder %s238, %s239
      %p250 = scmp.eq.s32.totalorder %s31, 0
      %p251 = por %p249, %p250
      %p252 = scmp.ne.s32.totalorder %s238, %s239
      %p253 = scmp.eq.s32.totalorder %s32, 1
      %p254 = por %p252, %p253
      %p256 = scmp.ne.s32.totalorder %s239, %s255
      %p257 = scmp.eq.s32.totalorder %s32, 0
      %p258 = por %p256, %p257
      %p259 = scmp.le.s32.totalorder 1, %s26
      %p260 = scmp.lt.s32.totalorder %s26, 3
      %p261 = pnand %p259, %p260
      %p262 = pneg %p261
      // Predicated region
      $region9: #{tpu_custom_call.1} parent=5 // pred_check
        _
      $region10: #{tpu_custom_call.1} parent=5 // pred_check_branch
        %264 = sbr.rel (%p261) target = $region12
      $region11: #{tpu_custom_call.1} parent=5 // pred_region
        %s265 = ssub.s32 %s26, 1
        // Predicated region
        $region13: #{tpu_custom_call.1} parent=11 // pred_check
          %p266 = pneg %p99
        $region14: #{tpu_custom_call.1} parent=11 // pred_check_branch
          %268 = sbr.rel (%p266) target = $region16
        $region15: #{tpu_custom_call.1} parent=11 // pred_region
          %s270 = ssub.s32 2048, 2048
          %271 = vsyncadd [#allocation7], %s270
          %s272 = sshll.u32 [#allocation8], 4
          %s273 = int_to_ptr.vmem [resolvable:$true] %s272
          %278 = dma.hbm_to_vmem [thread:$0]  %s2, 2048, %s273, [#allocation7], 128, 128, 8
        $region16: #{tpu_custom_call.1} parent=11 // pred_fallthru
          _
        // Predicated region
        $region17: #{tpu_custom_call.1} parent=11 // pred_check
          %p279 = pneg %p120
        $region18: #{tpu_custom_call.1} parent=11 // pred_check_branch
          %281 = sbr.rel (%p279) target = $region20
        $region19: #{tpu_custom_call.1} parent=11 // pred_region
          %s283 = ssub.s32 1024, 1024
          %284 = vsyncadd [#allocation10], %s283
          %s285 = sshll.u32 [#allocation9], 4
          %s286 = int_to_ptr.vmem [resolvable:$true] %s285
          %291 = dma.hbm_to_vmem [thread:$0]  %s3, 1024, %s286, [#allocation10], 64, 64, 4
        $region20: #{tpu_custom_call.1} parent=11 // pred_fallthru
          _
        // Predicated region
        $region21: #{tpu_custom_call.1} parent=11 // pred_check
          %p292 = pneg %p141
        $region22: #{tpu_custom_call.1} parent=11 // pred_check_branch
          %294 = sbr.rel (%p292) target = $region24
        $region23: #{tpu_custom_call.1} parent=11 // pred_region
          %s296 = ssub.s32 1024, 1024
          %297 = vsyncadd [#allocation10], %s296
          %s298 = sshll.u32 [#allocation11], 4
          %s299 = int_to_ptr.vmem [resolvable:$true] %s298
          %304 = dma.hbm_to_vmem [thread:$0]  %s4, 1024, %s299, [#allocation10], 64, 64, 4
        $region24: #{tpu_custom_call.1} parent=11 // pred_fallthru
          _
        // Predicated region
        $region25: #{tpu_custom_call.1} parent=11 // pred_check
          %p305 = pneg %p162
        $region26: #{tpu_custom_call.1} parent=11 // pred_check_branch
          %307 = sbr.rel (%p305) target = $region28
        $region27: #{tpu_custom_call.1} parent=11 // pred_region
          %s309 = ssub.s32 8192, 8192
          %310 = vsyncadd [#allocation13], %s309
          %s311 = sshll.u32 [#allocation12], 4
          %s312 = int_to_ptr.vmem [resolvable:$true] %s311
          %317 = dma.hbm_to_vmem [thread:$0]  %s5, 8192, %s312, [#allocation13], 256, 256, 16
        $region28: #{tpu_custom_call.1} parent=11 // pred_fallthru
          _
        // Predicated region
        $region29: #{tpu_custom_call.1} parent=11 // pred_check
          %p318 = pneg %p183
        $region30: #{tpu_custom_call.1} parent=11 // pred_check_branch
          %320 = sbr.rel (%p318) target = $region32
        $region31: #{tpu_custom_call.1} parent=11 // pred_region
          _
        $region32: #{tpu_custom_call.1} parent=11 // pred_fallthru
          _
        // Predicated region
        $region33: #{tpu_custom_call.1} parent=11 // pred_check
          %p321 = pneg %p204
        $region34: #{tpu_custom_call.1} parent=11 // pred_check_branch
          %323 = sbr.rel (%p321) target = $region36
        $region35: #{tpu_custom_call.1} parent=11 // pred_region
          %s325 = ssub.s32 8192, 8192
          %326 = vsyncadd [#allocation13], %s325
          %s327 = sshll.u32 [#allocation14], 4
          %s328 = int_to_ptr.vmem [resolvable:$true] %s327
          %333 = dma.hbm_to_vmem [thread:$0]  %s7, 8192, %s328, [#allocation13], 64, 64, 4
        $region36: #{tpu_custom_call.1} parent=11 // pred_fallthru
          _
        // Predicated region
        $region37: #{tpu_custom_call.1} parent=11 // pred_check
          %p334 = pneg %p225
        $region38: #{tpu_custom_call.1} parent=11 // pred_check_branch
          %336 = sbr.rel (%p334) target = $region40
        $region39: #{tpu_custom_call.1} parent=11 // pred_region
          _
        $region40: #{tpu_custom_call.1} parent=11 // pred_fallthru
          _
      $region12: #{tpu_custom_call.1} parent=5 // pred_fallthru
        _
      %p337 = scmp.lt.s32.totalorder %s26, 2
      // Predicated region
      $region41: #{tpu_custom_call.1} parent=5 // pred_check
        %p338 = pneg %p337
      $region42: #{tpu_custom_call.1} parent=5 // pred_check_branch
        %340 = sbr.rel (%p338) target = $region44
      $region43: #{tpu_custom_call.1} parent=5 // pred_region
        // Predicated region
        $region45: #{tpu_custom_call.1} parent=43 // pred_check
          %p341 = pneg %p46
        $region46: #{tpu_custom_call.1} parent=43 // pred_check_branch
          %343 = sbr.rel (%p341) target = $region48
        $region47: #{tpu_custom_call.1} parent=43 // pred_region
          %s344 = sand.u32 %s36, 1
          %s345 = scalar_lea.sflag [#allocation4], %s344
          %s346 = sand.u32 %s36, 1
          %s347 = smul.addr %s346, 8
          %s348 = scalar_lea.vmem [#allocation3], %s347
          %s350 = ssub.s32 128, 128
          %351 = vsyncadd %s345, %s350
          %s352 = smul.addr %s26, 128
          %s353 = scalar_lea.hbm %s0, %s352
          %s355 = sshll.u32 %s348, 4
          %s356 = int_to_ptr.vmem [resolvable:$true] %s355
          %358 = dma.hbm_to_vmem [thread:$0]  %s353, 128, %s356, %s345
        $region48: #{tpu_custom_call.1} parent=43 // pred_fallthru
          _
        // Predicated region
        $region49: #{tpu_custom_call.1} parent=43 // pred_check
          %p359 = pneg %p72
        $region50: #{tpu_custom_call.1} parent=43 // pred_check_branch
          %361 = sbr.rel (%p359) target = $region52
        $region51: #{tpu_custom_call.1} parent=43 // pred_region
          %s362 = sand.u32 %s26, 1
          %s363 = scalar_lea.sflag [#allocation7], %s362
          %s364 = sand.u32 %s62, 1
          %s365 = smul.addr %s364, 8
          %s366 = scalar_lea.vmem [#allocation6], %s365
          %s368 = ssub.s32 128, 128
          %369 = vsyncadd %s363, %s368
          %s370 = smul.addr %s26, 128
          %s371 = scalar_lea.hbm %s1, %s370
          %s373 = sshll.u32 %s366, 4
          %s374 = int_to_ptr.vmem [resolvable:$true] %s373
          %376 = dma.hbm_to_vmem [thread:$0]  %s371, 128, %s374, %s363
        $region52: #{tpu_custom_call.1} parent=43 // pred_fallthru
          _
      $region44: #{tpu_custom_call.1} parent=5 // pred_fallthru
        _
      %p377 = scmp.le.s32.totalorder 1, %s26
      %p378 = scmp.lt.s32.totalorder %s26, 3
      %p379 = pnand %p377, %p378
      %p380 = pneg %p379
      // Predicated region
      $region53: #{tpu_custom_call.1} parent=5 // pred_check
        _
      $region54: #{tpu_custom_call.1} parent=5 // pred_check_branch
        %382 = sbr.rel (%p379) target = $region56
      $region55: #{tpu_custom_call.1} parent=5 // pred_region
        %s383 = ssub.s32 %s26, 1
        %s384 = sand.u32 %s39, 1
        %s385 = scalar_lea.sflag [#allocation4], %s384
        %s386 = sand.u32 %s39, 1
        %s387 = smul.addr %s386, 8
        %s388 = scalar_lea.vmem [#allocation3], %s387
        // Predicated region
        $region57: #{tpu_custom_call.1} parent=55 // pred_check
          %p389 = pneg %p52
        $region58: #{tpu_custom_call.1} parent=55 // pred_check_branch
          %391 = sbr.rel (%p389) target = $region60
        $region59: #{tpu_custom_call.1} parent=55 // pred_region
          %392 = dma.done %s385, 128
        $region60: #{tpu_custom_call.1} parent=55 // pred_fallthru
          _
        %s393 = sand.u32 %s31, 1
        %s394 = scalar_lea.sflag [#allocation7], %s393
        %s395 = sand.u32 %s65, 1
        %s396 = smul.addr %s395, 8
        %s397 = scalar_lea.vmem [#allocation6], %s396
        // Predicated region
        $region61: #{tpu_custom_call.1} parent=55 // pred_check
          %p398 = pneg %p78
        $region62: #{tpu_custom_call.1} parent=55 // pred_check_branch
          %400 = sbr.rel (%p398) target = $region64
        $region63: #{tpu_custom_call.1} parent=55 // pred_region
          %401 = dma.done %s394, 128
        $region64: #{tpu_custom_call.1} parent=55 // pred_fallthru
          _
        // Predicated region
        $region65: #{tpu_custom_call.1} parent=55 // pred_check
          %p402 = pneg %p99
        $region66: #{tpu_custom_call.1} parent=55 // pred_check_branch
          %404 = sbr.rel (%p402) target = $region68
        $region67: #{tpu_custom_call.1} parent=55 // pred_region
          %405 = dma.done [#allocation7], 2048
        $region68: #{tpu_custom_call.1} parent=55 // pred_fallthru
          _
        // Predicated region
        $region69: #{tpu_custom_call.1} parent=55 // pred_check
          %p406 = pneg %p120
        $region70: #{tpu_custom_call.1} parent=55 // pred_check_branch
          %408 = sbr.rel (%p406) target = $region72
        $region71: #{tpu_custom_call.1} parent=55 // pred_region
          %409 = dma.done [#allocation10], 1024
        $region72: #{tpu_custom_call.1} parent=55 // pred_fallthru
          _
        // Predicated region
        $region73: #{tpu_custom_call.1} parent=55 // pred_check
          %p410 = pneg %p141
        $region74: #{tpu_custom_call.1} parent=55 // pred_check_branch
          %412 = sbr.rel (%p410) target = $region76
        $region75: #{tpu_custom_call.1} parent=55 // pred_region
          %413 = dma.done [#allocation10], 1024
        $region76: #{tpu_custom_call.1} parent=55 // pred_fallthru
          _
        // Predicated region
        $region77: #{tpu_custom_call.1} parent=55 // pred_check
          %p414 = pneg %p162
        $region78: #{tpu_custom_call.1} parent=55 // pred_check_branch
          %416 = sbr.rel (%p414) target = $region80
        $region79: #{tpu_custom_call.1} parent=55 // pred_region
          %417 = dma.done [#allocation13], 8192
        $region80: #{tpu_custom_call.1} parent=55 // pred_fallthru
          _
        // Predicated region
        $region81: #{tpu_custom_call.1} parent=55 // pred_check
          %p418 = pneg %p204
        $region82: #{tpu_custom_call.1} parent=55 // pred_check_branch
          %420 = sbr.rel (%p418) target = $region84
        $region83: #{tpu_custom_call.1} parent=55 // pred_region
          %421 = dma.done [#allocation13], 8192
        $region84: #{tpu_custom_call.1} parent=55 // pred_fallthru
          _
        %s422 = sand.u32 %s39, 1
        %s423 = scalar_lea.sflag [#allocation4], %s422
        %s424 = sand.u32 %s39, 1
        %s425 = smul.addr %s424, 8
        %s426 = scalar_lea.vmem [#allocation3], %s425
        %p427 = pneg %p52
        %p428 = pneg %p49
        %s429 = sand.u32 %s31, 1
        %s430 = scalar_lea.sflag [#allocation7], %s429
        %s431 = sand.u32 %s65, 1
        %s432 = smul.addr %s431, 8
        %s433 = scalar_lea.vmem [#allocation6], %s432
        %p434 = pneg %p78
        %p435 = pneg %p75
        %p436 = pneg %p99
        %p437 = pneg %p96
        %p438 = pneg %p120
        %p439 = pneg %p117
        %p440 = pneg %p141
        %p441 = pneg %p138
        %p442 = pneg %p162
        %p443 = pneg %p159
        %p444 = pneg %p183
        %p445 = pneg %p180
        %p446 = pneg %p204
        %p447 = pneg %p201
        %p448 = pneg %p225
        %p449 = pneg %p222
        %p450 = pneg %p251
        %p451 = pneg %p248
        %s452 = sand.u32 %s238, 1
        %s453 = scalar_lea.sflag [#allocation5], %s452
        %s454 = sand.u32 %s238, 1
        %s455 = smul.addr %s454, 8
        %s456 = scalar_lea.vmem [#allocation15], %s455
        %v458 = vld [vmem:[%s388] sm:$0xff]
        %v459 = vpack.c.bf16 %v458, %v458
        %v460 = vld [vmem:[%s397] sm:$0xff]
        %v461 = vadd.f32 %v458, %v460
        %v462 = vpack.c.bf16 %v461, %v461
        %v463 = vld [vmem:[%s8] sm:$0xff]
        %v464 = vld [vmem:[%s8 + $0x8] sm:$0x1]
        %v465 = vld [vmem:[#allocation8] sm:$0xff]
        %v466 = vld [vmem:[#allocation8 + $0x8] sm:$0xff]
        %v467 = vld [vmem:[#allocation8 + $0x10] sm:$0xff]
        %v468 = vld [vmem:[#allocation8 + $0x18] sm:$0xff]
        %v469 = vld [vmem:[#allocation8 + $0x20] sm:$0xff]
        %v470 = vld [vmem:[#allocation8 + $0x28] sm:$0xff]
        %v471 = vld [vmem:[#allocation8 + $0x30] sm:$0xff]
        %v472 = vld [vmem:[#allocation8 + $0x38] sm:$0xff]
        %v473 = vld [vmem:[#allocation8 + $0x40] sm:$0xff]
        %v474 = vld [vmem:[#allocation8 + $0x48] sm:$0xff]
        %v475 = vld [vmem:[#allocation8 + $0x50] sm:$0xff]
        %v476 = vld [vmem:[#allocation8 + $0x58] sm:$0xff]
        %v477 = vld [vmem:[#allocation8 + $0x60] sm:$0xff]
        %v478 = vld [vmem:[#allocation8 + $0x68] sm:$0xff]
        %v479 = vld [vmem:[#allocation8 + $0x70] sm:$0xff]
        %v480 = vld [vmem:[#allocation8 + $0x78] sm:$0xff]
        %v497 = vunpack.c.l.b16 %v465
        %v498 = vunpack.c.h.b16 %v465
        %v499 = vunpack.c.l.b16 %v466
        %v500 = vunpack.c.h.b16 %v466
        %v501 = vunpack.c.l.b16 %v467
        %v502 = vunpack.c.h.b16 %v467
        %v503 = vunpack.c.l.b16 %v468
        %v504 = vunpack.c.h.b16 %v468
        %v505 = vunpack.c.l.b16 %v469
        %v506 = vunpack.c.h.b16 %v469
        %v507 = vunpack.c.l.b16 %v470
        %v508 = vunpack.c.h.b16 %v470
        %v509 = vunpack.c.l.b16 %v471
        %v510 = vunpack.c.h.b16 %v471
        %v511 = vunpack.c.l.b16 %v472
        %v512 = vunpack.c.h.b16 %v472
        %v513 = vunpack.c.l.b16 %v473
        %v514 = vunpack.c.h.b16 %v473
        %v515 = vunpack.c.l.b16 %v474
        %v516 = vunpack.c.h.b16 %v474
        %v517 = vunpack.c.l.b16 %v475
        %v518 = vunpack.c.h.b16 %v475
        %v519 = vunpack.c.l.b16 %v476
        %v520 = vunpack.c.h.b16 %v476
        %v521 = vunpack.c.l.b16 %v477
        %v522 = vunpack.c.h.b16 %v477
        %v523 = vunpack.c.l.b16 %v478
        %v524 = vunpack.c.h.b16 %v478
        %v525 = vunpack.c.l.b16 %v479
        %v526 = vunpack.c.h.b16 %v479
        %v527 = vunpack.c.l.b16 %v480
        %v528 = vunpack.c.h.b16 %v480
        %v529 = vpack.c.b16 %v499, %v497
        %v530 = vpack.c.b16 %v500, %v498
        %v531 = vpack.c.b16 %v503, %v501
        %v532 = vpack.c.b16 %v504, %v502
        %v533 = vpack.c.b16 %v507, %v505
        %v534 = vpack.c.b16 %v508, %v506
        %v535 = vpack.c.b16 %v511, %v509
        %v536 = vpack.c.b16 %v512, %v510
        %v537 = vpack.c.b16 %v515, %v513
        %v538 = vpack.c.b16 %v516, %v514
        %v539 = vpack.c.b16 %v519, %v517
        %v540 = vpack.c.b16 %v520, %v518
        %v541 = vpack.c.b16 %v523, %v521
        %v542 = vpack.c.b16 %v524, %v522
        %v543 = vpack.c.b16 %v527, %v525
        %v544 = vpack.c.b16 %v528, %v526
        %561 = vmatprep.subr.bf16.mxu0 %v530
        %562 = vmatpush1.bf16.msra.mxu0 %v529
        %563 = vmatprep.subr.bf16.mxu0 %v532
        %564 = vmatpush1.bf16.msra.mxu0 %v531
        %565 = vmatprep.subr.bf16.mxu0 %v534
        %566 = vmatpush1.bf16.msra.mxu0 %v533
        %567 = vmatprep.subr.bf16.mxu0 %v536
        %568 = vmatpush1.bf16.msra.mxu0 %v535
        %569 = vmatprep.subr.bf16.mxu0 %v538
        %570 = vmatpush1.bf16.msra.mxu0 %v537
        %571 = vmatprep.subr.bf16.mxu0 %v540
        %572 = vmatpush1.bf16.msra.mxu0 %v539
        %573 = vmatprep.subr.bf16.mxu0 %v542
        %574 = vmatpush1.bf16.msra.mxu0 %v541
        %575 = vmatprep.subr.bf16.mxu0 %v544
        %576 = vmatpush1.bf16.msra.mxu0 %v543
        %577 = vmatprep.subr.bf16.mxu0 0
        %578 = vmatpush1.bf16.msra.mxu0 0
        %579 = vmatprep.subr.bf16.mxu0 0
        %580 = vmatpush1.bf16.msra.mxu0 0
        %581 = vmatprep.subr.bf16.mxu0 0
        %582 = vmatpush1.bf16.msra.mxu0 0
        %583 = vmatprep.subr.bf16.mxu0 0
        %584 = vmatpush1.bf16.msra.mxu0 0
        %585 = vmatprep.subr.bf16.mxu0 0
        %586 = vmatpush1.bf16.msra.mxu0 0
        %587 = vmatprep.subr.bf16.mxu0 0
        %588 = vmatpush1.bf16.msra.mxu0 0
        %589 = vmatprep.subr.bf16.mxu0 0
        %590 = vmatpush1.bf16.msra.mxu0 0
        %591 = vmatprep.subr.bf16.mxu0 0
        %592 = vmatpush1.bf16.msra.mxu0 0
        %593 = vmatprep.mubr.bf16.mxu0 0
        %594 = vmatmul.mubr.bf16.gmra.mrb[0].mxu0 %v462
        %v595 = vpop.f32.mrb[0].mxu0
        %v596 = vadd.f32 0.0, %v595
        %v597 = vpop.f32.mrb[0].mxu0
        %v598 = vadd.f32 0.0, %v597
        %v599 = vpop.f32.mrb[0].mxu0
        %v600 = vpop.f32.mrb[0].mxu0
        %601 = vdwg.mxu0
        %v602 = vlaneseq
        %v603 = vshrl.u32 %v602, 7
        %v604 = vsub.s32 0, %v603
        %v605 = vrot.slane %v463, %v604
        %v606 = vadd.f32 %v596, %v605
        %v607 = vlaneseq
        %v608 = vshrl.u32 %v607, 7
        %v609 = vsub.s32 1, %v608
        %v610 = vrot.slane %v463, %v609
        %v611 = vadd.f32 %v598, %v610
        %v612 = vld [vmem:[#allocation9] sm:$0xf]
        %v613 = vld [vmem:[#allocation9 + $0x4] sm:$0xf]
        %v614 = vld [vmem:[#allocation9 + $0x8] sm:$0xf]
        %v615 = vld [vmem:[#allocation9 + $0xc] sm:$0xf]
        %v616 = vld [vmem:[#allocation9 + $0x10] sm:$0xf]
        %v617 = vld [vmem:[#allocation9 + $0x14] sm:$0xf]
        %v618 = vld [vmem:[#allocation9 + $0x18] sm:$0xf]
        %v619 = vld [vmem:[#allocation9 + $0x1c] sm:$0xf]
        %v620 = vld [vmem:[#allocation9 + $0x20] sm:$0xf]
        %v621 = vld [vmem:[#allocation9 + $0x24] sm:$0xf]
        %v622 = vld [vmem:[#allocation9 + $0x28] sm:$0xf]
        %v623 = vld [vmem:[#allocation9 + $0x2c] sm:$0xf]
        %v624 = vld [vmem:[#allocation9 + $0x30] sm:$0xf]
        %v625 = vld [vmem:[#allocation9 + $0x34] sm:$0xf]
        %v626 = vld [vmem:[#allocation9 + $0x38] sm:$0xf]
        %v627 = vld [vmem:[#allocation9 + $0x3c] sm:$0xf]
        %v628 = vlaneseq
        %v629 = vshrl.u32 %v628, 7
        %v630 = vsub.s32 2, %v629
        %v631 = vrot.slane %v463, %v630
        %v648 = vunpack.c.l.b16 %v612
        %v649 = vunpack.c.l.b16 %v613
        %v650 = vunpack.c.l.b16 %v614
        %v651 = vunpack.c.l.b16 %v615
        %v652 = vunpack.c.l.b16 %v616
        %v653 = vunpack.c.l.b16 %v617
        %v654 = vunpack.c.l.b16 %v618
        %v655 = vunpack.c.l.b16 %v619
        %v656 = vunpack.c.l.b16 %v620
        %v657 = vunpack.c.l.b16 %v621
        %v658 = vunpack.c.l.b16 %v622
        %v659 = vunpack.c.l.b16 %v623
        %v660 = vunpack.c.l.b16 %v624
        %v661 = vunpack.c.l.b16 %v625
        %v662 = vunpack.c.l.b16 %v626
        %v663 = vunpack.c.l.b16 %v627
        %v664 = vpack.c.b16 %v649, %v648
        %v665 = vpack.c.b16 %v651, %v650
        %v666 = vpack.c.b16 %v653, %v652
        %v667 = vpack.c.b16 %v655, %v654
        %v668 = vpack.c.b16 %v657, %v656
        %v669 = vpack.c.b16 %v659, %v658
        %v670 = vpack.c.b16 %v661, %v660
        %v671 = vpack.c.b16 %v663, %v662
        %680 = vmatprep.subr.bf16.mxu0 0
        %681 = vmatpush1.bf16.msra.mxu0 %v664
        %682 = vmatprep.subr.bf16.mxu0 0
        %683 = vmatpush1.bf16.msra.mxu0 %v665
        %684 = vmatprep.subr.bf16.mxu0 0
        %685 = vmatpush1.bf16.msra.mxu0 %v666
        %686 = vmatprep.subr.bf16.mxu0 0
        %687 = vmatpush1.bf16.msra.mxu0 %v667
        %688 = vmatprep.subr.bf16.mxu0 0
        %689 = vmatpush1.bf16.msra.mxu0 %v668
        %690 = vmatprep.subr.bf16.mxu0 0
        %691 = vmatpush1.bf16.msra.mxu0 %v669
        %692 = vmatprep.subr.bf16.mxu0 0
        %693 = vmatpush1.bf16.msra.mxu0 %v670
        %694 = vmatprep.subr.bf16.mxu0 0
        %695 = vmatpush1.bf16.msra.mxu0 %v671
        %696 = vmatprep.subr.bf16.mxu0 0
        %697 = vmatpush1.bf16.msra.mxu0 0
        %698 = vmatprep.subr.bf16.mxu0 0
        %699 = vmatpush1.bf16.msra.mxu0 0
        %700 = vmatprep.subr.bf16.mxu0 0
        %701 = vmatpush1.bf16.msra.mxu0 0
        %702 = vmatprep.subr.bf16.mxu0 0
        %703 = vmatpush1.bf16.msra.mxu0 0
        %704 = vmatprep.subr.bf16.mxu0 0
        %705 = vmatpush1.bf16.msra.mxu0 0
        %706 = vmatprep.subr.bf16.mxu0 0
        %707 = vmatpush1.bf16.msra.mxu0 0
        %708 = vmatprep.subr.bf16.mxu0 0
        %709 = vmatpush1.bf16.msra.mxu0 0
        %710 = vmatprep.subr.bf16.mxu0 0
        %711 = vmatpush1.bf16.msra.mxu0 0
        %712 = vmatprep.mubr.bf16.mxu0 0
        %713 = vmatmul.mubr.bf16.gmra.mrb[0].mxu0 %v459
        %v714 = vpop.f32.mrb[0].mxu0
        %v715 = vadd.f32 %v631, %v714
        %v716 = vpop.f32.mrb[0].mxu0
        %v717 = vpop.f32.mrb[0].mxu0
        %v718 = vpop.f32.mrb[0].mxu0
        %719 = vdwg.mxu0
        %721 = vrot.lane.b32.xlu0 %v606, 96
        %v722 = vpop.permute.xlu0 %721
        %724 = vrot.lane.b32.xlu0 %v606, 64
        %v725 = vpop.permute.xlu0 %724
        %727 = vrot.lane.b32.xlu0 %v606, 32
        %v728 = vpop.permute.xlu0 %727
        %v730 = vpack.c.bf16 %v606, %v606
        %v731 = vpack.c.bf16 %v722, %v722
        %v732 = vpack.c.bf16 %v725, %v725
        %v733 = vpack.c.bf16 %v728, %v728
        %735 = vrot.lane.b32.xlu0 %v611, 96
        %v736 = vpop.permute.xlu0 %735
        %738 = vrot.lane.b32.xlu0 %v611, 64
        %v739 = vpop.permute.xlu0 %738
        %741 = vrot.lane.b32.xlu0 %v611, 32
        %v742 = vpop.permute.xlu0 %741
        %v744 = vpack.c.bf16 %v611, %v611
        %v745 = vpack.c.bf16 %v736, %v736
        %v746 = vpack.c.bf16 %v739, %v739
        %v747 = vpack.c.bf16 %v742, %v742
        %749 = vrot.lane.b32.xlu0 %v715, 96
        %v750 = vpop.permute.xlu0 %749
        %752 = vrot.lane.b32.xlu0 %v715, 64
        %v753 = vpop.permute.xlu0 %752
        %755 = vrot.lane.b32.xlu0 %v715, 32
        %v756 = vpop.permute.xlu0 %755
        %v758 = vpack.c.bf16 %v715, %v715
        %v759 = vpack.c.bf16 %v750, %v750
        %v760 = vpack.c.bf16 %v753, %v753
        %v761 = vpack.c.bf16 %v756, %v756
        %vm762 = vcmask 261120
        %v764 = vsel %vm762, %v730, 0
        %v767 = vsel %vm762, %v744, 0
        %769 = vmatprep.subr.bf16.mxu0 0
        %770 = vmatpush1.bf16.xpose.msra.mxu0 %v767
        %771 = vmatprep.subr.bf16.mxu0 0
        %772 = vmatpush1.bf16.xpose.msra.mxu0 0
        %773 = vmatprep.subr.bf16.mxu0 0
        %774 = vmatpush1.bf16.xpose.msra.mxu0 0
        %775 = vmatprep.subr.bf16.mxu0 0
        %776 = vmatpush1.bf16.xpose.msra.mxu0 0
        %777 = vmatprep.subr.bf16.mxu0 0
        %778 = vmatpush1.bf16.xpose.msra.mxu0 0
        %779 = vmatprep.subr.bf16.mxu0 0
        %780 = vmatpush1.bf16.xpose.msra.mxu0 0
        %781 = vmatprep.subr.bf16.mxu0 0
        %782 = vmatpush1.bf16.xpose.msra.mxu0 0
        %783 = vmatprep.subr.bf16.mxu0 0
        %784 = vmatpush1.bf16.xpose.msra.mxu0 0
        %785 = vmatprep.subr.bf16.mxu0 0
        %786 = vmatpush1.bf16.xpose.msra.mxu0 0
        %787 = vmatprep.subr.bf16.mxu0 0
        %788 = vmatpush1.bf16.xpose.msra.mxu0 0
        %789 = vmatprep.subr.bf16.mxu0 0
        %790 = vmatpush1.bf16.xpose.msra.mxu0 0
        %791 = vmatprep.subr.bf16.mxu0 0
        %792 = vmatpush1.bf16.xpose.msra.mxu0 0
        %793 = vmatprep.subr.bf16.mxu0 0
        %794 = vmatpush1.bf16.xpose.msra.mxu0 0
        %795 = vmatprep.subr.bf16.mxu0 0
        %796 = vmatpush1.bf16.xpose.msra.mxu0 0
        %797 = vmatprep.subr.bf16.mxu0 0
        %798 = vmatpush1.bf16.xpose.msra.mxu0 0
        %799 = vmatprep.subr.bf16.mxu0 0
        %800 = vmatpush1.bf16.xpose.msra.mxu0 0
        %801 = vmatprep.mubr.bf16.mxu0 0
        %802 = vmatmul.mubr.bf16.gmra.mrb[0].mxu0 %v764
        %v803 = vpop.f32.mrb[0].mxu0
        %v804 = vadd.f32 0.0, %v803
        %v805 = vpop.f32.mrb[0].mxu0
        %v806 = vpop.f32.mrb[0].mxu0
        %v807 = vpop.f32.mrb[0].mxu0
        %808 = vdwg.mxu0
        %v810 = vsel %vm762, %v731, 0
        %v813 = vsel %vm762, %v745, 0
        %815 = vmatprep.subr.bf16.mxu0 0
        %816 = vmatpush1.bf16.xpose.msra.mxu0 %v813
        %817 = vmatprep.subr.bf16.mxu0 0
        %818 = vmatpush1.bf16.xpose.msra.mxu0 0
        %819 = vmatprep.subr.bf16.mxu0 0
        %820 = vmatpush1.bf16.xpose.msra.mxu0 0
        %821 = vmatprep.subr.bf16.mxu0 0
        %822 = vmatpush1.bf16.xpose.msra.mxu0 0
        %823 = vmatprep.subr.bf16.mxu0 0
        %824 = vmatpush1.bf16.xpose.msra.mxu0 0
        %825 = vmatprep.subr.bf16.mxu0 0
        %826 = vmatpush1.bf16.xpose.msra.mxu0 0
        %827 = vmatprep.subr.bf16.mxu0 0
        %828 = vmatpush1.bf16.xpose.msra.mxu0 0
        %829 = vmatprep.subr.bf16.mxu0 0
        %830 = vmatpush1.bf16.xpose.msra.mxu0 0
        %831 = vmatprep.subr.bf16.mxu0 0
        %832 = vmatpush1.bf16.xpose.msra.mxu0 0
        %833 = vmatprep.subr.bf16.mxu0 0
        %834 = vmatpush1.bf16.xpose.msra.mxu0 0
        %835 = vmatprep.subr.bf16.mxu0 0
        %836 = vmatpush1.bf16.xpose.msra.mxu0 0
        %837 = vmatprep.subr.bf16.mxu0 0
        %838 = vmatpush1.bf16.xpose.msra.mxu0 0
        %839 = vmatprep.subr.bf16.mxu0 0
        %840 = vmatpush1.bf16.xpose.msra.mxu0 0
        %841 = vmatprep.subr.bf16.mxu0 0
        %842 = vmatpush1.bf16.xpose.msra.mxu0 0
        %843 = vmatprep.subr.bf16.mxu0 0
        %844 = vmatpush1.bf16.xpose.msra.mxu0 0
        %845 = vmatprep.subr.bf16.mxu0 0
        %846 = vmatpush1.bf16.xpose.msra.mxu0 0
        %847 = vmatprep.mubr.bf16.mxu0 0
        %848 = vmatmul.mubr.bf16.gmra.mrb[0].mxu0 %v810
        %v849 = vpop.f32.mrb[0].mxu0
        %v850 = vadd.f32 0.0, %v849
        %v851 = vpop.f32.mrb[0].mxu0
        %v852 = vpop.f32.mrb[0].mxu0
        %v853 = vpop.f32.mrb[0].mxu0
        %854 = vdwg.mxu0
        %v856 = vsel %vm762, %v732, 0
        %v859 = vsel %vm762, %v746, 0
        %861 = vmatprep.subr.bf16.mxu0 0
        %862 = vmatpush1.bf16.xpose.msra.mxu0 %v859
        %863 = vmatprep.subr.bf16.mxu0 0
        %864 = vmatpush1.bf16.xpose.msra.mxu0 0
        %865 = vmatprep.subr.bf16.mxu0 0
        %866 = vmatpush1.bf16.xpose.msra.mxu0 0
        %867 = vmatprep.subr.bf16.mxu0 0
        %868 = vmatpush1.bf16.xpose.msra.mxu0 0
        %869 = vmatprep.subr.bf16.mxu0 0
        %870 = vmatpush1.bf16.xpose.msra.mxu0 0
        %871 = vmatprep.subr.bf16.mxu0 0
        %872 = vmatpush1.bf16.xpose.msra.mxu0 0
        %873 = vmatprep.subr.bf16.mxu0 0
        %874 = vmatpush1.bf16.xpose.msra.mxu0 0
        %875 = vmatprep.subr.bf16.mxu0 0
        %876 = vmatpush1.bf16.xpose.msra.mxu0 0
        %877 = vmatprep.subr.bf16.mxu0 0
        %878 = vmatpush1.bf16.xpose.msra.mxu0 0
        %879 = vmatprep.subr.bf16.mxu0 0
        %880 = vmatpush1.bf16.xpose.msra.mxu0 0
        %881 = vmatprep.subr.bf16.mxu0 0
        %882 = vmatpush1.bf16.xpose.msra.mxu0 0
        %883 = vmatprep.subr.bf16.mxu0 0
        %884 = vmatpush1.bf16.xpose.msra.mxu0 0
        %885 = vmatprep.subr.bf16.mxu0 0
        %886 = vmatpush1.bf16.xpose.msra.mxu0 0
        %887 = vmatprep.subr.bf16.mxu0 0
        %888 = vmatpush1.bf16.xpose.msra.mxu0 0
        %889 = vmatprep.subr.bf16.mxu0 0
        %890 = vmatpush1.bf16.xpose.msra.mxu0 0
        %891 = vmatprep.subr.bf16.mxu0 0
        %892 = vmatpush1.bf16.xpose.msra.mxu0 0
        %893 = vmatprep.mubr.bf16.mxu0 0
        %894 = vmatmul.mubr.bf16.gmra.mrb[0].mxu0 %v856
        %v895 = vpop.f32.mrb[0].mxu0
        %v896 = vadd.f32 0.0, %v895
        %v897 = vpop.f32.mrb[0].mxu0
        %v898 = vpop.f32.mrb[0].mxu0
        %v899 = vpop.f32.mrb[0].mxu0
        %900 = vdwg.mxu0
        %v902 = vsel %vm762, %v733, 0
        %v905 = vsel %vm762, %v747, 0
        %907 = vmatprep.subr.bf16.mxu0 0
        %908 = vmatpush1.bf16.xpose.msra.mxu0 %v905
        %909 = vmatprep.subr.bf16.mxu0 0
        %910 = vmatpush1.bf16.xpose.msra.mxu0 0
        %911 = vmatprep.subr.bf16.mxu0 0
        %912 = vmatpush1.bf16.xpose.msra.mxu0 0
        %913 = vmatprep.subr.bf16.mxu0 0
        %914 = vmatpush1.bf16.xpose.msra.mxu0 0
        %915 = vmatprep.subr.bf16.mxu0 0
        %916 = vmatpush1.bf16.xpose.msra.mxu0 0
        %917 = vmatprep.subr.bf16.mxu0 0
        %918 = vmatpush1.bf16.xpose.msra.mxu0 0
        %919 = vmatprep.subr.bf16.mxu0 0
        %920 = vmatpush1.bf16.xpose.msra.mxu0 0
        %921 = vmatprep.subr.bf16.mxu0 0
        %922 = vmatpush1.bf16.xpose.msra.mxu0 0
        %923 = vmatprep.subr.bf16.mxu0 0
        %924 = vmatpush1.bf16.xpose.msra.mxu0 0
        %925 = vmatprep.subr.bf16.mxu0 0
        %926 = vmatpush1.bf16.xpose.msra.mxu0 0
        %927 = vmatprep.subr.bf16.mxu0 0
        %928 = vmatpush1.bf16.xpose.msra.mxu0 0
        %929 = vmatprep.subr.bf16.mxu0 0
        %930 = vmatpush1.bf16.xpose.msra.mxu0 0
        %931 = vmatprep.subr.bf16.mxu0 0
        %932 = vmatpush1.bf16.xpose.msra.mxu0 0
        %933 = vmatprep.subr.bf16.mxu0 0
        %934 = vmatpush1.bf16.xpose.msra.mxu0 0
        %935 = vmatprep.subr.bf16.mxu0 0
        %936 = vmatpush1.bf16.xpose.msra.mxu0 0
        %937 = vmatprep.subr.bf16.mxu0 0
        %938 = vmatpush1.bf16.xpose.msra.mxu0 0
        %939 = vmatprep.mubr.bf16.mxu0 0
        %940 = vmatmul.mubr.bf16.gmra.mrb[0].mxu0 %v902
        %v941 = vpop.f32.mrb[0].mxu0
        %v942 = vadd.f32 0.0, %v941
        %v943 = vpop.f32.mrb[0].mxu0
        %v944 = vpop.f32.mrb[0].mxu0
        %v945 = vpop.f32.mrb[0].mxu0
        %946 = vdwg.mxu0
        %vm947 = vcmask 64512
        %v948 = vsel %vm947, %v804, -inf
        %949 = vmax.xlane.f32.xlu0 %v948
        %v950 = vpop.xlane.xlu0 %949
        %v951 = vsel %vm947, %v850, -inf
        %952 = vmax.xlane.f32.xlu0 %v951
        %v953 = vpop.xlane.xlu0 %952
        %v954 = vsel %vm947, %v896, -inf
        %955 = vmax.xlane.f32.xlu0 %v954
        %v956 = vpop.xlane.xlu0 %955
        %v957 = vsel %vm947, %v942, -inf
        %958 = vmax.xlane.f32.xlu0 %v957
        %v959 = vpop.xlane.xlu0 %958
        %v960 = vsub.f32 %v804, %v950
        %v961 = vsub.f32 %v850, %v953
        %v962 = vsub.f32 %v896, %v956
        %v963 = vsub.f32 %v942, %v959
        %v964 = vmul.f32 %v960, 1.442695
        %v965 = vpow.pop %v964
        %v966 = vmul.f32 %v961, 1.442695
        %v967 = vpow.pop %v966
        %v968 = vmul.f32 %v962, 1.442695
        %v969 = vpow.pop %v968
        %v970 = vmul.f32 %v963, 1.442695
        %v971 = vpow.pop %v970
        %v972 = vsel %vm947, %v965, 0.0
        %973 = vadd.xlane.f32.xlu0 %v972
        %v974 = vpop.xlane.xlu0 %973
        %v975 = vsel %vm947, %v967, 0.0
        %976 = vadd.xlane.f32.xlu0 %v975
        %v977 = vpop.xlane.xlu0 %976
        %v978 = vsel %vm947, %v969, 0.0
        %979 = vadd.xlane.f32.xlu0 %v978
        %v980 = vpop.xlane.xlu0 %979
        %v981 = vsel %vm947, %v971, 0.0
        %982 = vadd.xlane.f32.xlu0 %v981
        %v983 = vpop.xlane.xlu0 %982
        %v984 = vrcp.pop %v974
        %v985 = vrcp.pop %v977
        %v986 = vrcp.pop %v980
        %v987 = vrcp.pop %v983
        %v988 = vmul.f32 %v965, %v984
        %v989 = vmul.f32 %v967, %v985
        %v990 = vmul.f32 %v969, %v986
        %v991 = vmul.f32 %v971, %v987
        %v992 = vpack.c.bf16 %v988, %v988
        %v993 = vpack.c.bf16 %v989, %v989
        %v994 = vpack.c.bf16 %v990, %v990
        %v995 = vpack.c.bf16 %v991, %v991
        %v997 = vsel %vm947, %v992, 0
        %vm999 = vcmask 1043456
        %v1001 = vsel %vm999, %v758, 0
        %1003 = vmatprep.subr.bf16.mxu0 0
        %1004 = vmatpush1.bf16.msra.mxu0 %v1001
        %1005 = vmatprep.subr.bf16.mxu0 0
        %1006 = vmatpush1.bf16.msra.mxu0 0
        %1007 = vmatprep.subr.bf16.mxu0 0
        %1008 = vmatpush1.bf16.msra.mxu0 0
        %1009 = vmatprep.subr.bf16.mxu0 0
        %1010 = vmatpush1.bf16.msra.mxu0 0
        %1011 = vmatprep.subr.bf16.mxu0 0
        %1012 = vmatpush1.bf16.msra.mxu0 0
        %1013 = vmatprep.subr.bf16.mxu0 0
        %1014 = vmatpush1.bf16.msra.mxu0 0
        %1015 = vmatprep.subr.bf16.mxu0 0
        %1016 = vmatpush1.bf16.msra.mxu0 0
        %1017 = vmatprep.subr.bf16.mxu0 0
        %1018 = vmatpush1.bf16.msra.mxu0 0
        %1019 = vmatprep.subr.bf16.mxu0 0
        %1020 = vmatpush1.bf16.msra.mxu0 0
        %1021 = vmatprep.subr.bf16.mxu0 0
        %1022 = vmatpush1.bf16.msra.mxu0 0
        %1023 = vmatprep.subr.bf16.mxu0 0
        %1024 = vmatpush1.bf16.msra.mxu0 0
        %1025 = vmatprep.subr.bf16.mxu0 0
        %1026 = vmatpush1.bf16.msra.mxu0 0
        %1027 = vmatprep.subr.bf16.mxu0 0
        %1028 = vmatpush1.bf16.msra.mxu0 0
        %1029 = vmatprep.subr.bf16.mxu0 0
        %1030 = vmatpush1.bf16.msra.mxu0 0
        %1031 = vmatprep.subr.bf16.mxu0 0
        %1032 = vmatpush1.bf16.msra.mxu0 0
        %1033 = vmatprep.subr.bf16.mxu0 0
        %1034 = vmatpush1.bf16.msra.mxu0 0
        %1035 = vmatprep.mubr.bf16.mxu0 0
        %1036 = vmatmul.mubr.bf16.gmra.mrb[0].mxu0 %v997
        %v1037 = vpop.f32.mrb[0].mxu0
        %v1038 = vadd.f32 0.0, %v1037
        %v1039 = vpop.f32.mrb[0].mxu0
        %v1040 = vpop.f32.mrb[0].mxu0
        %v1041 = vpop.f32.mrb[0].mxu0
        %1042 = vdwg.mxu0
        %v1044 = vsel %vm947, %v993, 0
        %v1047 = vsel %vm999, %v759, 0
        %1049 = vmatprep.subr.bf16.mxu0 0
        %1050 = vmatpush1.bf16.msra.mxu0 %v1047
        %1051 = vmatprep.subr.bf16.mxu0 0
        %1052 = vmatpush1.bf16.msra.mxu0 0
        %1053 = vmatprep.subr.bf16.mxu0 0
        %1054 = vmatpush1.bf16.msra.mxu0 0
        %1055 = vmatprep.subr.bf16.mxu0 0
        %1056 = vmatpush1.bf16.msra.mxu0 0
        %1057 = vmatprep.subr.bf16.mxu0 0
        %1058 = vmatpush1.bf16.msra.mxu0 0
        %1059 = vmatprep.subr.bf16.mxu0 0
        %1060 = vmatpush1.bf16.msra.mxu0 0
        %1061 = vmatprep.subr.bf16.mxu0 0
        %1062 = vmatpush1.bf16.msra.mxu0 0
        %1063 = vmatprep.subr.bf16.mxu0 0
        %1064 = vmatpush1.bf16.msra.mxu0 0
        %1065 = vmatprep.subr.bf16.mxu0 0
        %1066 = vmatpush1.bf16.msra.mxu0 0
        %1067 = vmatprep.subr.bf16.mxu0 0
        %1068 = vmatpush1.bf16.msra.mxu0 0
        %1069 = vmatprep.subr.bf16.mxu0 0
        %1070 = vmatpush1.bf16.msra.mxu0 0
        %1071 = vmatprep.subr.bf16.mxu0 0
        %1072 = vmatpush1.bf16.msra.mxu0 0
        %1073 = vmatprep.subr.bf16.mxu0 0
        %1074 = vmatpush1.bf16.msra.mxu0 0
        %1075 = vmatprep.subr.bf16.mxu0 0
        %1076 = vmatpush1.bf16.msra.mxu0 0
        %1077 = vmatprep.subr.bf16.mxu0 0
        %1078 = vmatpush1.bf16.msra.mxu0 0
        %1079 = vmatprep.subr.bf16.mxu0 0
        %1080 = vmatpush1.bf16.msra.mxu0 0
        %1081 = vmatprep.mubr.bf16.mxu0 0
        %1082 = vmatmul.mubr.bf16.gmra.mrb[0].mxu0 %v1044
        %v1083 = vpop.f32.mrb[0].mxu0
        %v1084 = vadd.f32 0.0, %v1083
        %v1085 = vpop.f32.mrb[0].mxu0
        %v1086 = vpop.f32.mrb[0].mxu0
        %v1087 = vpop.f32.mrb[0].mxu0
        %1088 = vdwg.mxu0
        %v1090 = vsel %vm947, %v994, 0
        %v1093 = vsel %vm999, %v760, 0
        %1095 = vmatprep.subr.bf16.mxu0 0
        %1096 = vmatpush1.bf16.msra.mxu0 %v1093
        %1097 = vmatprep.subr.bf16.mxu0 0
        %1098 = vmatpush1.bf16.msra.mxu0 0
        %1099 = vmatprep.subr.bf16.mxu0 0
        %1100 = vmatpush1.bf16.msra.mxu0 0
        %1101 = vmatprep.subr.bf16.mxu0 0
        %1102 = vmatpush1.bf16.msra.mxu0 0
        %1103 = vmatprep.subr.bf16.mxu0 0
        %1104 = vmatpush1.bf16.msra.mxu0 0
        %1105 = vmatprep.subr.bf16.mxu0 0
        %1106 = vmatpush1.bf16.msra.mxu0 0
        %1107 = vmatprep.subr.bf16.mxu0 0
        %1108 = vmatpush1.bf16.msra.mxu0 0
        %1109 = vmatprep.subr.bf16.mxu0 0
        %1110 = vmatpush1.bf16.msra.mxu0 0
        %1111 = vmatprep.subr.bf16.mxu0 0
        %1112 = vmatpush1.bf16.msra.mxu0 0
        %1113 = vmatprep.subr.bf16.mxu0 0
        %1114 = vmatpush1.bf16.msra.mxu0 0
        %1115 = vmatprep.subr.bf16.mxu0 0
        %1116 = vmatpush1.bf16.msra.mxu0 0
        %1117 = vmatprep.subr.bf16.mxu0 0
        %1118 = vmatpush1.bf16.msra.mxu0 0
        %1119 = vmatprep.subr.bf16.mxu0 0
        %1120 = vmatpush1.bf16.msra.mxu0 0
        %1121 = vmatprep.subr.bf16.mxu0 0
        %1122 = vmatpush1.bf16.msra.mxu0 0
        %1123 = vmatprep.subr.bf16.mxu0 0
        %1124 = vmatpush1.bf16.msra.mxu0 0
        %1125 = vmatprep.subr.bf16.mxu0 0
        %1126 = vmatpush1.bf16.msra.mxu0 0
        %1127 = vmatprep.mubr.bf16.mxu0 0
        %1128 = vmatmul.mubr.bf16.gmra.mrb[0].mxu0 %v1090
        %v1129 = vpop.f32.mrb[0].mxu0
        %v1130 = vadd.f32 0.0, %v1129
        %v1131 = vpop.f32.mrb[0].mxu0
        %v1132 = vpop.f32.mrb[0].mxu0
        %v1133 = vpop.f32.mrb[0].mxu0
        %1134 = vdwg.mxu0
        %v1136 = vsel %vm947, %v995, 0
        %v1139 = vsel %vm999, %v761, 0
        %1141 = vmatprep.subr.bf16.mxu0 0
        %1142 = vmatpush1.bf16.msra.mxu0 %v1139
        %1143 = vmatprep.subr.bf16.mxu0 0
        %1144 = vmatpush1.bf16.msra.mxu0 0
        %1145 = vmatprep.subr.bf16.mxu0 0
        %1146 = vmatpush1.bf16.msra.mxu0 0
        %1147 = vmatprep.subr.bf16.mxu0 0
        %1148 = vmatpush1.bf16.msra.mxu0 0
        %1149 = vmatprep.subr.bf16.mxu0 0
        %1150 = vmatpush1.bf16.msra.mxu0 0
        %1151 = vmatprep.subr.bf16.mxu0 0
        %1152 = vmatpush1.bf16.msra.mxu0 0
        %1153 = vmatprep.subr.bf16.mxu0 0
        %1154 = vmatpush1.bf16.msra.mxu0 0
        %1155 = vmatprep.subr.bf16.mxu0 0
        %1156 = vmatpush1.bf16.msra.mxu0 0
        %1157 = vmatprep.subr.bf16.mxu0 0
        %1158 = vmatpush1.bf16.msra.mxu0 0
        %1159 = vmatprep.subr.bf16.mxu0 0
        %1160 = vmatpush1.bf16.msra.mxu0 0
        %1161 = vmatprep.subr.bf16.mxu0 0
        %1162 = vmatpush1.bf16.msra.mxu0 0
        %1163 = vmatprep.subr.bf16.mxu0 0
        %1164 = vmatpush1.bf16.msra.mxu0 0
        %1165 = vmatprep.subr.bf16.mxu0 0
        %1166 = vmatpush1.bf16.msra.mxu0 0
        %1167 = vmatprep.subr.bf16.mxu0 0
        %1168 = vmatpush1.bf16.msra.mxu0 0
        %1169 = vmatprep.subr.bf16.mxu0 0
        %1170 = vmatpush1.bf16.msra.mxu0 0
        %1171 = vmatprep.subr.bf16.mxu0 0
        %1172 = vmatpush1.bf16.msra.mxu0 0
        %1173 = vmatprep.mubr.bf16.mxu0 0
        %1174 = vmatmul.mubr.bf16.gmra.mrb[0].mxu0 %v1136
        %v1175 = vpop.f32.mrb[0].mxu0
        %v1176 = vadd.f32 0.0, %v1175
        %v1177 = vpop.f32.mrb[0].mxu0
        %v1178 = vpop.f32.mrb[0].mxu0
        %v1179 = vpop.f32.mrb[0].mxu0
        %1180 = vdwg.mxu0
        %1182 = vrot.lane.b32.xlu0 %v1084, 32
        %v1183 = vpop.permute.xlu0 %1182
        %1186 = vrot.lane.b32.xlu0 %v1130, 64
        %v1187 = vpop.permute.xlu0 %1186
        %1190 = vrot.lane.b32.xlu0 %v1176, 96
        %v1191 = vpop.permute.xlu0 %1190
        %v1193 = vsel %vm762, %v1038, %v1183
        %vm1194 = vcmask 523264
        %v1195 = vsel %vm1194, %v1193, %v1187
        %vm1196 = vcmask 785408
        %v1197 = vsel %vm1196, %v1195, %v1191
        %v1198 = vpack.c.bf16 %v1197, %v1197
        %v1199 = vld [vmem:[#allocation11] sm:$0xf]
        %v1200 = vld [vmem:[#allocation11 + $0x4] sm:$0xf]
        %v1201 = vld [vmem:[#allocation11 + $0x8] sm:$0xf]
        %v1202 = vld [vmem:[#allocation11 + $0xc] sm:$0xf]
        %v1203 = vld [vmem:[#allocation11 + $0x10] sm:$0xf]
        %v1204 = vld [vmem:[#allocation11 + $0x14] sm:$0xf]
        %v1205 = vld [vmem:[#allocation11 + $0x18] sm:$0xf]
        %v1206 = vld [vmem:[#allocation11 + $0x1c] sm:$0xf]
        %v1207 = vld [vmem:[#allocation11 + $0x20] sm:$0xf]
        %v1208 = vld [vmem:[#allocation11 + $0x24] sm:$0xf]
        %v1209 = vld [vmem:[#allocation11 + $0x28] sm:$0xf]
        %v1210 = vld [vmem:[#allocation11 + $0x2c] sm:$0xf]
        %v1211 = vld [vmem:[#allocation11 + $0x30] sm:$0xf]
        %v1212 = vld [vmem:[#allocation11 + $0x34] sm:$0xf]
        %v1213 = vld [vmem:[#allocation11 + $0x38] sm:$0xf]
        %v1214 = vld [vmem:[#allocation11 + $0x3c] sm:$0xf]
        %v1215 = vlaneseq
        %v1216 = vshrl.u32 %v1215, 7
        %v1217 = vsub.s32 3, %v1216
        %v1218 = vrot.slane %v463, %v1217
        %v1235 = vunpack.c.l.b16 %v1199
        %v1236 = vunpack.c.l.b16 %v1200
        %v1237 = vunpack.c.l.b16 %v1201
        %v1238 = vunpack.c.l.b16 %v1202
        %v1239 = vunpack.c.l.b16 %v1203
        %v1240 = vunpack.c.l.b16 %v1204
        %v1241 = vunpack.c.l.b16 %v1205
        %v1242 = vunpack.c.l.b16 %v1206
        %v1243 = vunpack.c.l.b16 %v1207
        %v1244 = vunpack.c.l.b16 %v1208
        %v1245 = vunpack.c.l.b16 %v1209
        %v1246 = vunpack.c.l.b16 %v1210
        %v1247 = vunpack.c.l.b16 %v1211
        %v1248 = vunpack.c.l.b16 %v1212
        %v1249 = vunpack.c.l.b16 %v1213
        %v1250 = vunpack.c.l.b16 %v1214
        %v1251 = vpack.c.b16 %v1236, %v1235
        %v1252 = vpack.c.b16 %v1238, %v1237
        %v1253 = vpack.c.b16 %v1240, %v1239
        %v1254 = vpack.c.b16 %v1242, %v1241
        %v1255 = vpack.c.b16 %v1244, %v1243
        %v1256 = vpack.c.b16 %v1246, %v1245
        %v1257 = vpack.c.b16 %v1248, %v1247
        %v1258 = vpack.c.b16 %v1250, %v1249
        %1267 = vmatprep.subr.bf16.mxu0 0
        %1268 = vmatpush1.bf16.msra.mxu0 %v1251
        %1269 = vmatprep.subr.bf16.mxu0 0
        %1270 = vmatpush1.bf16.msra.mxu0 %v1252
        %1271 = vmatprep.subr.bf16.mxu0 0
        %1272 = vmatpush1.bf16.msra.mxu0 %v1253
        %1273 = vmatprep.subr.bf16.mxu0 0
        %1274 = vmatpush1.bf16.msra.mxu0 %v1254
        %1275 = vmatprep.subr.bf16.mxu0 0
        %1276 = vmatpush1.bf16.msra.mxu0 %v1255
        %1277 = vmatprep.subr.bf16.mxu0 0
        %1278 = vmatpush1.bf16.msra.mxu0 %v1256
        %1279 = vmatprep.subr.bf16.mxu0 0
        %1280 = vmatpush1.bf16.msra.mxu0 %v1257
        %1281 = vmatprep.subr.bf16.mxu0 0
        %1282 = vmatpush1.bf16.msra.mxu0 %v1258
        %1283 = vmatprep.subr.bf16.mxu0 0
        %1284 = vmatpush1.bf16.msra.mxu0 0
        %1285 = vmatprep.subr.bf16.mxu0 0
        %1286 = vmatpush1.bf16.msra.mxu0 0
        %1287 = vmatprep.subr.bf16.mxu0 0
        %1288 = vmatpush1.bf16.msra.mxu0 0
        %1289 = vmatprep.subr.bf16.mxu0 0
        %1290 = vmatpush1.bf16.msra.mxu0 0
        %1291 = vmatprep.subr.bf16.mxu0 0
        %1292 = vmatpush1.bf16.msra.mxu0 0
        %1293 = vmatprep.subr.bf16.mxu0 0
        %1294 = vmatpush1.bf16.msra.mxu0 0
        %1295 = vmatprep.subr.bf16.mxu0 0
        %1296 = vmatpush1.bf16.msra.mxu0 0
        %1297 = vmatprep.subr.bf16.mxu0 0
        %1298 = vmatpush1.bf16.msra.mxu0 0
        %1299 = vmatprep.mubr.bf16.mxu0 0
        %1300 = vmatmul.mubr.bf16.gmra.mrb[0].mxu0 %v1198
        %v1301 = vpop.f32.mrb[0].mxu0
        %v1302 = vadd.f32 %v1218, %v1301
        %v1303 = vpop.f32.mrb[0].mxu0
        %v1304 = vpop.f32.mrb[0].mxu0
        %v1305 = vpop.f32.mrb[0].mxu0
        %1306 = vdwg.mxu0
        %v1307 = vadd.f32 %v458, %v1302
        %1308 = vadd.xlane.f32.xlu0 %v1307
        %v1309 = vpop.xlane.xlu0 %1308
        %v1310 = vrcp.pop 128.0
        %v1311 = vmul.f32 %v1309, %v1310
        %v1312 = vsub.f32 %v1307, %v1311
        %v1313 = vmul.f32 %v1312, %v1312
        %1314 = vadd.xlane.f32.xlu0 %v1313
        %v1315 = vpop.xlane.xlu0 %1314
        %v1316 = vmul.f32 %v1315, %v1310
        %v1317 = vadd.f32 %v1316, 1e-05
        %v1318 = vrsqrt.pop %v1317
        %v1319 = vmul.f32 %v1312, %v1318
        %v1320 = vlaneseq
        %v1321 = vshrl.u32 %v1320, 7
        %v1322 = vsub.s32 5, %v1321
        %v1323 = vrot.slane %v463, %v1322
        %v1324 = vmul.f32 %v1319, %v1323
        %v1325 = vlaneseq
        %v1326 = vshrl.u32 %v1325, 7
        %v1327 = vsub.s32 6, %v1326
        %v1328 = vrot.slane %v463, %v1327
        %v1329 = vadd.f32 %v1324, %v1328
        %v1330 = vpack.c.bf16 %v1329, %v1329
        %1331 = vst [vmem:[#allocation2] sm:$0xff] 0.0
        %v1332 = vld [vmem:[#allocation12] sm:$0xff]
        %v1333 = vld [vmem:[#allocation12 + $0x8] sm:$0xff]
        %v1334 = vld [vmem:[#allocation12 + $0x10] sm:$0xff]
        %v1335 = vld [vmem:[#allocation12 + $0x18] sm:$0xff]
        %v1336 = vld [vmem:[#allocation12 + $0x20] sm:$0xff]
        %v1337 = vld [vmem:[#allocation12 + $0x28] sm:$0xff]
        %v1338 = vld [vmem:[#allocation12 + $0x30] sm:$0xff]
        %v1339 = vld [vmem:[#allocation12 + $0x38] sm:$0xff]
        %v1340 = vld [vmem:[#allocation12 + $0x40] sm:$0xff]
        %v1341 = vld [vmem:[#allocation12 + $0x48] sm:$0xff]
        %v1342 = vld [vmem:[#allocation12 + $0x50] sm:$0xff]
        %v1343 = vld [vmem:[#allocation12 + $0x58] sm:$0xff]
        %v1344 = vld [vmem:[#allocation12 + $0x60] sm:$0xff]
        %v1345 = vld [vmem:[#allocation12 + $0x68] sm:$0xff]
        %v1346 = vld [vmem:[#allocation12 + $0x70] sm:$0xff]
        %v1347 = vld [vmem:[#allocation12 + $0x78] sm:$0xff]
        %v1348 = vld [vmem:[#allocation12 + $0x80] sm:$0xff]
        %v1349 = vld [vmem:[#allocation12 + $0x88] sm:$0xff]
        %v1350 = vld [vmem:[#allocation12 + $0x90] sm:$0xff]
        %v1351 = vld [vmem:[#allocation12 + $0x98] sm:$0xff]
        %v1352 = vld [vmem:[#allocation12 + $0xa0] sm:$0xff]
        %v1353 = vld [vmem:[#allocation12 + $0xa8] sm:$0xff]
        %v1354 = vld [vmem:[#allocation12 + $0xb0] sm:$0xff]
        %v1355 = vld [vmem:[#allocation12 + $0xb8] sm:$0xff]
        %v1356 = vld [vmem:[#allocation12 + $0xc0] sm:$0xff]
        %v1357 = vld [vmem:[#allocation12 + $0xc8] sm:$0xff]
        %v1358 = vld [vmem:[#allocation12 + $0xd0] sm:$0xff]
        %v1359 = vld [vmem:[#allocation12 + $0xd8] sm:$0xff]
        %v1360 = vld [vmem:[#allocation12 + $0xe0] sm:$0xff]
        %v1361 = vld [vmem:[#allocation12 + $0xe8] sm:$0xff]
        %v1362 = vld [vmem:[#allocation12 + $0xf0] sm:$0xff]
        %v1363 = vld [vmem:[#allocation12 + $0xf8] sm:$0xff]
        %v1364 = vld [vmem:[%s6] sm:$0xf]
        %v1366 = vlaneseq
        %v1367 = vshrl.u32 %v1366, 7
        %v1368 = vsub.s32 0, %v1367
        %v1369 = vrot.slane %v1364, %v1368
        %v1370 = vlaneseq
        %v1371 = vshrl.u32 %v1370, 7
        %v1372 = vsub.s32 1, %v1371
        %v1373 = vrot.slane %v1364, %v1372
        %v1374 = vlaneseq
        %v1375 = vshrl.u32 %v1374, 7
        %v1376 = vsub.s32 2, %v1375
        %v1377 = vrot.slane %v1364, %v1376
        %v1378 = vlaneseq
        %v1379 = vshrl.u32 %v1378, 7
        %v1380 = vsub.s32 3, %v1379
        %v1381 = vrot.slane %v1364, %v1380
        %v1418 = vunpack.c.l.b16 %v1332
        %v1419 = vunpack.c.h.b16 %v1332
        %v1420 = vunpack.c.l.b16 %v1333
        %v1421 = vunpack.c.h.b16 %v1333
        %v1422 = vunpack.c.l.b16 %v1334
        %v1423 = vunpack.c.h.b16 %v1334
        %v1424 = vunpack.c.l.b16 %v1335
        %v1425 = vunpack.c.h.b16 %v1335
        %v1426 = vunpack.c.l.b16 %v1336
        %v1427 = vunpack.c.h.b16 %v1336
        %v1428 = vunpack.c.l.b16 %v1337
        %v1429 = vunpack.c.h.b16 %v1337
        %v1430 = vunpack.c.l.b16 %v1338
        %v1431 = vunpack.c.h.b16 %v1338
        %v1432 = vunpack.c.l.b16 %v1339
        %v1433 = vunpack.c.h.b16 %v1339
        %v1434 = vunpack.c.l.b16 %v1340
        %v1435 = vunpack.c.h.b16 %v1340
        %v1436 = vunpack.c.l.b16 %v1341
        %v1437 = vunpack.c.h.b16 %v1341
        %v1438 = vunpack.c.l.b16 %v1342
        %v1439 = vunpack.c.h.b16 %v1342
        %v1440 = vunpack.c.l.b16 %v1343
        %v1441 = vunpack.c.h.b16 %v1343
        %v1442 = vunpack.c.l.b16 %v1344
        %v1443 = vunpack.c.h.b16 %v1344
        %v1444 = vunpack.c.l.b16 %v1345
        %v1445 = vunpack.c.h.b16 %v1345
        %v1446 = vunpack.c.l.b16 %v1346
        %v1447 = vunpack.c.h.b16 %v1346
        %v1448 = vunpack.c.l.b16 %v1347
        %v1449 = vunpack.c.h.b16 %v1347
        %v1450 = vunpack.c.l.b16 %v1348
        %v1451 = vunpack.c.h.b16 %v1348
        %v1452 = vunpack.c.l.b16 %v1349
        %v1453 = vunpack.c.h.b16 %v1349
        %v1454 = vunpack.c.l.b16 %v1350
        %v1455 = vunpack.c.h.b16 %v1350
        %v1456 = vunpack.c.l.b16 %v1351
        %v1457 = vunpack.c.h.b16 %v1351
        %v1458 = vunpack.c.l.b16 %v1352
        %v1459 = vunpack.c.h.b16 %v1352
        %v1460 = vunpack.c.l.b16 %v1353
        %v1461 = vunpack.c.h.b16 %v1353
        %v1462 = vunpack.c.l.b16 %v1354
        %v1463 = vunpack.c.h.b16 %v1354
        %v1464 = vunpack.c.l.b16 %v1355
        %v1465 = vunpack.c.h.b16 %v1355
        %v1466 = vunpack.c.l.b16 %v1356
        %v1467 = vunpack.c.h.b16 %v1356
        %v1468 = vunpack.c.l.b16 %v1357
        %v1469 = vunpack.c.h.b16 %v1357
        %v1470 = vunpack.c.l.b16 %v1358
        %v1471 = vunpack.c.h.b16 %v1358
        %v1472 = vunpack.c.l.b16 %v1359
        %v1473 = vunpack.c.h.b16 %v1359
        %v1474 = vunpack.c.l.b16 %v1360
        %v1475 = vunpack.c.h.b16 %v1360
        %v1476 = vunpack.c.l.b16 %v1361
        %v1477 = vunpack.c.h.b16 %v1361
        %v1478 = vunpack.c.l.b16 %v1362
        %v1479 = vunpack.c.h.b16 %v1362
        %v1480 = vunpack.c.l.b16 %v1363
        %v1481 = vunpack.c.h.b16 %v1363
        %v1482 = vpack.c.b16 %v1422, %v1418
        %v1483 = vpack.c.b16 %v1423, %v1419
        %v1484 = vpack.c.b16 %v1424, %v1420
        %v1485 = vpack.c.b16 %v1425, %v1421
        %v1486 = vpack.c.b16 %v1430, %v1426
        %v1487 = vpack.c.b16 %v1431, %v1427
        %v1488 = vpack.c.b16 %v1432, %v1428
        %v1489 = vpack.c.b16 %v1433, %v1429
        %v1490 = vpack.c.b16 %v1438, %v1434
        %v1491 = vpack.c.b16 %v1439, %v1435
        %v1492 = vpack.c.b16 %v1440, %v1436
        %v1493 = vpack.c.b16 %v1441, %v1437
        %v1494 = vpack.c.b16 %v1446, %v1442
        %v1495 = vpack.c.b16 %v1447, %v1443
        %v1496 = vpack.c.b16 %v1448, %v1444
        %v1497 = vpack.c.b16 %v1449, %v1445
        %v1498 = vpack.c.b16 %v1454, %v1450
        %v1499 = vpack.c.b16 %v1455, %v1451
        %v1500 = vpack.c.b16 %v1456, %v1452
        %v1501 = vpack.c.b16 %v1457, %v1453
        %v1502 = vpack.c.b16 %v1462, %v1458
        %v1503 = vpack.c.b16 %v1463, %v1459
        %v1504 = vpack.c.b16 %v1464, %v1460
        %v1505 = vpack.c.b16 %v1465, %v1461
        %v1506 = vpack.c.b16 %v1470, %v1466
        %v1507 = vpack.c.b16 %v1471, %v1467
        %v1508 = vpack.c.b16 %v1472, %v1468
        %v1509 = vpack.c.b16 %v1473, %v1469
        %v1510 = vpack.c.b16 %v1478, %v1474
        %v1511 = vpack.c.b16 %v1479, %v1475
        %v1512 = vpack.c.b16 %v1480, %v1476
        %v1513 = vpack.c.b16 %v1481, %v1477
        %1546 = vmatprep.subr.bf16.mxu0 %v1483
        %1547 = vmatpush1.bf16.msra.mxu0 %v1482
        %1548 = vmatprep.subr.bf16.mxu0 %v1487
        %1549 = vmatpush1.bf16.msra.mxu0 %v1486
        %1550 = vmatprep.subr.bf16.mxu0 %v1491
        %1551 = vmatpush1.bf16.msra.mxu0 %v1490
        %1552 = vmatprep.subr.bf16.mxu0 %v1495
        %1553 = vmatpush1.bf16.msra.mxu0 %v1494
        %1554 = vmatprep.subr.bf16.mxu0 %v1499
        %1555 = vmatpush1.bf16.msra.mxu0 %v1498
        %1556 = vmatprep.subr.bf16.mxu0 %v1503
        %1557 = vmatpush1.bf16.msra.mxu0 %v1502
        %1558 = vmatprep.subr.bf16.mxu0 %v1507
        %1559 = vmatpush1.bf16.msra.mxu0 %v1506
        %1560 = vmatprep.subr.bf16.mxu0 %v1511
        %1561 = vmatpush1.bf16.msra.mxu0 %v1510
        %1562 = vmatprep.subr.bf16.mxu0 0
        %1563 = vmatpush1.bf16.msra.mxu0 0
        %1564 = vmatprep.subr.bf16.mxu0 0
        %1565 = vmatpush1.bf16.msra.mxu0 0
        %1566 = vmatprep.subr.bf16.mxu0 0
        %1567 = vmatpush1.bf16.msra.mxu0 0
        %1568 = vmatprep.subr.bf16.mxu0 0
        %1569 = vmatpush1.bf16.msra.mxu0 0
        %1570 = vmatprep.subr.bf16.mxu0 0
        %1571 = vmatpush1.bf16.msra.mxu0 0
        %1572 = vmatprep.subr.bf16.mxu0 0
        %1573 = vmatpush1.bf16.msra.mxu0 0
        %1574 = vmatprep.subr.bf16.mxu0 0
        %1575 = vmatpush1.bf16.msra.mxu0 0
        %1576 = vmatprep.subr.bf16.mxu0 0
        %1577 = vmatpush1.bf16.msra.mxu0 0
        %1578 = vmatprep.mubr.bf16.mxu0 0
        %1579 = vmatmul.mubr.bf16.gmra.mrb[0].mxu0 %v1330
        %v1580 = vpop.f32.mrb[0].mxu0
        %v1581 = vadd.f32 %v1369, %v1580
        %v1582 = vpop.f32.mrb[0].mxu0
        %v1583 = vadd.f32 %v1373, %v1582
        %v1584 = vpop.f32.mrb[0].mxu0
        %v1585 = vpop.f32.mrb[0].mxu0
        %1586 = vdwg.mxu0
        %1587 = vmatprep.subr.bf16.mxu0 %v1485
        %1588 = vmatpush1.bf16.msra.mxu0 %v1484
        %1589 = vmatprep.subr.bf16.mxu0 %v1489
        %1590 = vmatpush1.bf16.msra.mxu0 %v1488
        %1591 = vmatprep.subr.bf16.mxu0 %v1493
        %1592 = vmatpush1.bf16.msra.mxu0 %v1492
        %1593 = vmatprep.subr.bf16.mxu0 %v1497
        %1594 = vmatpush1.bf16.msra.mxu0 %v1496
        %1595 = vmatprep.subr.bf16.mxu0 %v1501
        %1596 = vmatpush1.bf16.msra.mxu0 %v1500
        %1597 = vmatprep.subr.bf16.mxu0 %v1505
        %1598 = vmatpush1.bf16.msra.mxu0 %v1504
        %1599 = vmatprep.subr.bf16.mxu0 %v1509
        %1600 = vmatpush1.bf16.msra.mxu0 %v1508
        %1601 = vmatprep.subr.bf16.mxu0 %v1513
        %1602 = vmatpush1.bf16.msra.mxu0 %v1512
        %1603 = vmatprep.subr.bf16.mxu0 0
        %1604 = vmatpush1.bf16.msra.mxu0 0
        %1605 = vmatprep.subr.bf16.mxu0 0
        %1606 = vmatpush1.bf16.msra.mxu0 0
        %1607 = vmatprep.subr.bf16.mxu0 0
        %1608 = vmatpush1.bf16.msra.mxu0 0
        %1609 = vmatprep.subr.bf16.mxu0 0
        %1610 = vmatpush1.bf16.msra.mxu0 0
        %1611 = vmatprep.subr.bf16.mxu0 0
        %1612 = vmatpush1.bf16.msra.mxu0 0
        %1613 = vmatprep.subr.bf16.mxu0 0
        %1614 = vmatpush1.bf16.msra.mxu0 0
        %1615 = vmatprep.subr.bf16.mxu0 0
        %1616 = vmatpush1.bf16.msra.mxu0 0
        %1617 = vmatprep.subr.bf16.mxu0 0
        %1618 = vmatpush1.bf16.msra.mxu0 0
        %1619 = vmatprep.mubr.bf16.mxu0 0
        %1620 = vmatmul.mubr.bf16.gmra.mrb[0].mxu0 %v1330
        %v1621 = vpop.f32.mrb[0].mxu0
        %v1622 = vadd.f32 %v1377, %v1621
        %v1623 = vpop.f32.mrb[0].mxu0
        %v1624 = vadd.f32 %v1381, %v1623
        %v1625 = vpop.f32.mrb[0].mxu0
        %v1626 = vpop.f32.mrb[0].mxu0
        %1627 = vdwg.mxu0
        %v1628 = vmax.f32 %v1581, 0.0
        %v1629 = vmax.f32 %v1583, 0.0
        %v1630 = vmax.f32 %v1622, 0.0
        %v1631 = vmax.f32 %v1624, 0.0
        %v1632 = vld [vmem:[#allocation2] sm:$0xff]
        %v1633 = vpack.c.bf16 %v1628, %v1628
        %v1634 = vpack.c.bf16 %v1629, %v1629
        %v1635 = vpack.c.bf16 %v1630, %v1630
        %v1636 = vpack.c.bf16 %v1631, %v1631
        %v1637 = vld [vmem:[#allocation14] sm:$0xf]
        %v1638 = vld [vmem:[#allocation14 + $0x4] sm:$0xf]
        %v1639 = vld [vmem:[#allocation14 + $0x8] sm:$0xf]
        %v1640 = vld [vmem:[#allocation14 + $0xc] sm:$0xf]
        %v1641 = vld [vmem:[#allocation14 + $0x10] sm:$0xf]
        %v1642 = vld [vmem:[#allocation14 + $0x14] sm:$0xf]
        %v1643 = vld [vmem:[#allocation14 + $0x18] sm:$0xf]
        %v1644 = vld [vmem:[#allocation14 + $0x1c] sm:$0xf]
        %v1645 = vld [vmem:[#allocation14 + $0x20] sm:$0xf]
        %v1646 = vld [vmem:[#allocation14 + $0x24] sm:$0xf]
        %v1647 = vld [vmem:[#allocation14 + $0x28] sm:$0xf]
        %v1648 = vld [vmem:[#allocation14 + $0x2c] sm:$0xf]
        %v1649 = vld [vmem:[#allocation14 + $0x30] sm:$0xf]
        %v1650 = vld [vmem:[#allocation14 + $0x34] sm:$0xf]
        %v1651 = vld [vmem:[#allocation14 + $0x38] sm:$0xf]
        %v1652 = vld [vmem:[#allocation14 + $0x3c] sm:$0xf]
        %v1653 = vld [vmem:[#allocation14 + $0x40] sm:$0xf]
        %v1654 = vld [vmem:[#allocation14 + $0x44] sm:$0xf]
        %v1655 = vld [vmem:[#allocation14 + $0x48] sm:$0xf]
        %v1656 = vld [vmem:[#allocation14 + $0x4c] sm:$0xf]
        %v1657 = vld [vmem:[#allocation14 + $0x50] sm:$0xf]
        %v1658 = vld [vmem:[#allocation14 + $0x54] sm:$0xf]
        %v1659 = vld [vmem:[#allocation14 + $0x58] sm:$0xf]
        %v1660 = vld [vmem:[#allocation14 + $0x5c] sm:$0xf]
        %v1661 = vld [vmem:[#allocation14 + $0x60] sm:$0xf]
        %v1662 = vld [vmem:[#allocation14 + $0x64] sm:$0xf]
        %v1663 = vld [vmem:[#allocation14 + $0x68] sm:$0xf]
        %v1664 = vld [vmem:[#allocation14 + $0x6c] sm:$0xf]
        %v1665 = vld [vmem:[#allocation14 + $0x70] sm:$0xf]
        %v1666 = vld [vmem:[#allocation14 + $0x74] sm:$0xf]
        %v1667 = vld [vmem:[#allocation14 + $0x78] sm:$0xf]
        %v1668 = vld [vmem:[#allocation14 + $0x7c] sm:$0xf]
        %v1669 = vld [vmem:[#allocation14 + $0x80] sm:$0xf]
        %v1670 = vld [vmem:[#allocation14 + $0x84] sm:$0xf]
        %v1671 = vld [vmem:[#allocation14 + $0x88] sm:$0xf]
        %v1672 = vld [vmem:[#allocation14 + $0x8c] sm:$0xf]
        %v1673 = vld [vmem:[#allocation14 + $0x90] sm:$0xf]
        %v1674 = vld [vmem:[#allocation14 + $0x94] sm:$0xf]
        %v1675 = vld [vmem:[#allocation14 + $0x98] sm:$0xf]
        %v1676 = vld [vmem:[#allocation14 + $0x9c] sm:$0xf]
        %v1677 = vld [vmem:[#allocation14 + $0xa0] sm:$0xf]
        %v1678 = vld [vmem:[#allocation14 + $0xa4] sm:$0xf]
        %v1679 = vld [vmem:[#allocation14 + $0xa8] sm:$0xf]
        %v1680 = vld [vmem:[#allocation14 + $0xac] sm:$0xf]
        %v1681 = vld [vmem:[#allocation14 + $0xb0] sm:$0xf]
        %v1682 = vld [vmem:[#allocation14 + $0xb4] sm:$0xf]
        %v1683 = vld [vmem:[#allocation14 + $0xb8] sm:$0xf]
        %v1684 = vld [vmem:[#allocation14 + $0xbc] sm:$0xf]
        %v1685 = vld [vmem:[#allocation14 + $0xc0] sm:$0xf]
        %v1686 = vld [vmem:[#allocation14 + $0xc4] sm:$0xf]
        %v1687 = vld [vmem:[#allocation14 + $0xc8] sm:$0xf]
        %v1688 = vld [vmem:[#allocation14 + $0xcc] sm:$0xf]
        %v1689 = vld [vmem:[#allocation14 + $0xd0] sm:$0xf]
        %v1690 = vld [vmem:[#allocation14 + $0xd4] sm:$0xf]
        %v1691 = vld [vmem:[#allocation14 + $0xd8] sm:$0xf]
        %v1692 = vld [vmem:[#allocation14 + $0xdc] sm:$0xf]
        %v1693 = vld [vmem:[#allocation14 + $0xe0] sm:$0xf]
        %v1694 = vld [vmem:[#allocation14 + $0xe4] sm:$0xf]
        %v1695 = vld [vmem:[#allocation14 + $0xe8] sm:$0xf]
        %v1696 = vld [vmem:[#allocation14 + $0xec] sm:$0xf]
        %v1697 = vld [vmem:[#allocation14 + $0xf0] sm:$0xf]
        %v1698 = vld [vmem:[#allocation14 + $0xf4] sm:$0xf]
        %v1699 = vld [vmem:[#allocation14 + $0xf8] sm:$0xf]
        %v1700 = vld [vmem:[#allocation14 + $0xfc] sm:$0xf]
        %v1765 = vunpack.c.l.b16 %v1637
        %v1766 = vunpack.c.l.b16 %v1638
        %v1767 = vunpack.c.l.b16 %v1639
        %v1768 = vunpack.c.l.b16 %v1640
        %v1769 = vunpack.c.l.b16 %v1641
        %v1770 = vunpack.c.l.b16 %v1642
        %v1771 = vunpack.c.l.b16 %v1643
        %v1772 = vunpack.c.l.b16 %v1644
        %v1773 = vunpack.c.l.b16 %v1645
        %v1774 = vunpack.c.l.b16 %v1646
        %v1775 = vunpack.c.l.b16 %v1647
        %v1776 = vunpack.c.l.b16 %v1648
        %v1777 = vunpack.c.l.b16 %v1649
        %v1778 = vunpack.c.l.b16 %v1650
        %v1779 = vunpack.c.l.b16 %v1651
        %v1780 = vunpack.c.l.b16 %v1652
        %v1781 = vunpack.c.l.b16 %v1653
        %v1782 = vunpack.c.l.b16 %v1654
        %v1783 = vunpack.c.l.b16 %v1655
        %v1784 = vunpack.c.l.b16 %v1656
        %v1785 = vunpack.c.l.b16 %v1657
        %v1786 = vunpack.c.l.b16 %v1658
        %v1787 = vunpack.c.l.b16 %v1659
        %v1788 = vunpack.c.l.b16 %v1660
        %v1789 = vunpack.c.l.b16 %v1661
        %v1790 = vunpack.c.l.b16 %v1662
        %v1791 = vunpack.c.l.b16 %v1663
        %v1792 = vunpack.c.l.b16 %v1664
        %v1793 = vunpack.c.l.b16 %v1665
        %v1794 = vunpack.c.l.b16 %v1666
        %v1795 = vunpack.c.l.b16 %v1667
        %v1796 = vunpack.c.l.b16 %v1668
        %v1797 = vunpack.c.l.b16 %v1669
        %v1798 = vunpack.c.l.b16 %v1670
        %v1799 = vunpack.c.l.b16 %v1671
        %v1800 = vunpack.c.l.b16 %v1672
        %v1801 = vunpack.c.l.b16 %v1673
        %v1802 = vunpack.c.l.b16 %v1674
        %v1803 = vunpack.c.l.b16 %v1675
        %v1804 = vunpack.c.l.b16 %v1676
        %v1805 = vunpack.c.l.b16 %v1677
        %v1806 = vunpack.c.l.b16 %v1678
        %v1807 = vunpack.c.l.b16 %v1679
        %v1808 = vunpack.c.l.b16 %v1680
        %v1809 = vunpack.c.l.b16 %v1681
        %v1810 = vunpack.c.l.b16 %v1682
        %v1811 = vunpack.c.l.b16 %v1683
        %v1812 = vunpack.c.l.b16 %v1684
        %v1813 = vunpack.c.l.b16 %v1685
        %v1814 = vunpack.c.l.b16 %v1686
        %v1815 = vunpack.c.l.b16 %v1687
        %v1816 = vunpack.c.l.b16 %v1688
        %v1817 = vunpack.c.l.b16 %v1689
        %v1818 = vunpack.c.l.b16 %v1690
        %v1819 = vunpack.c.l.b16 %v1691
        %v1820 = vunpack.c.l.b16 %v1692
        %v1821 = vunpack.c.l.b16 %v1693
        %v1822 = vunpack.c.l.b16 %v1694
        %v1823 = vunpack.c.l.b16 %v1695
        %v1824 = vunpack.c.l.b16 %v1696
        %v1825 = vunpack.c.l.b16 %v1697
        %v1826 = vunpack.c.l.b16 %v1698
        %v1827 = vunpack.c.l.b16 %v1699
        %v1828 = vunpack.c.l.b16 %v1700
        %v1829 = vpack.c.b16 %v1766, %v1765
        %v1830 = vpack.c.b16 %v1768, %v1767
        %v1831 = vpack.c.b16 %v1770, %v1769
        %v1832 = vpack.c.b16 %v1772, %v1771
        %v1833 = vpack.c.b16 %v1774, %v1773
        %v1834 = vpack.c.b16 %v1776, %v1775
        %v1835 = vpack.c.b16 %v1778, %v1777
        %v1836 = vpack.c.b16 %v1780, %v1779
        %v1837 = vpack.c.b16 %v1782, %v1781
        %v1838 = vpack.c.b16 %v1784, %v1783
        %v1839 = vpack.c.b16 %v1786, %v1785
        %v1840 = vpack.c.b16 %v1788, %v1787
        %v1841 = vpack.c.b16 %v1790, %v1789
        %v1842 = vpack.c.b16 %v1792, %v1791
        %v1843 = vpack.c.b16 %v1794, %v1793
        %v1844 = vpack.c.b16 %v1796, %v1795
        %v1845 = vpack.c.b16 %v1798, %v1797
        %v1846 = vpack.c.b16 %v1800, %v1799
        %v1847 = vpack.c.b16 %v1802, %v1801
        %v1848 = vpack.c.b16 %v1804, %v1803
        %v1849 = vpack.c.b16 %v1806, %v1805
        %v1850 = vpack.c.b16 %v1808, %v1807
        %v1851 = vpack.c.b16 %v1810, %v1809
        %v1852 = vpack.c.b16 %v1812, %v1811
        %v1853 = vpack.c.b16 %v1814, %v1813
        %v1854 = vpack.c.b16 %v1816, %v1815
        %v1855 = vpack.c.b16 %v1818, %v1817
        %v1856 = vpack.c.b16 %v1820, %v1819
        %v1857 = vpack.c.b16 %v1822, %v1821
        %v1858 = vpack.c.b16 %v1824, %v1823
        %v1859 = vpack.c.b16 %v1826, %v1825
        %v1860 = vpack.c.b16 %v1828, %v1827
        %1893 = vmatprep.subr.bf16.mxu0 0
        %1894 = vmatpush1.bf16.msra.mxu0 %v1829
        %1895 = vmatprep.subr.bf16.mxu0 0
        %1896 = vmatpush1.bf16.msra.mxu0 %v1830
        %1897 = vmatprep.subr.bf16.mxu0 0
        %1898 = vmatpush1.bf16.msra.mxu0 %v1831
        %1899 = vmatprep.subr.bf16.mxu0 0
        %1900 = vmatpush1.bf16.msra.mxu0 %v1832
        %1901 = vmatprep.subr.bf16.mxu0 0
        %1902 = vmatpush1.bf16.msra.mxu0 %v1833
        %1903 = vmatprep.subr.bf16.mxu0 0
        %1904 = vmatpush1.bf16.msra.mxu0 %v1834
        %1905 = vmatprep.subr.bf16.mxu0 0
        %1906 = vmatpush1.bf16.msra.mxu0 %v1835
        %1907 = vmatprep.subr.bf16.mxu0 0
        %1908 = vmatpush1.bf16.msra.mxu0 %v1836
        %1909 = vmatprep.subr.bf16.mxu0 0
        %1910 = vmatpush1.bf16.msra.mxu0 %v1837
        %1911 = vmatprep.subr.bf16.mxu0 0
        %1912 = vmatpush1.bf16.msra.mxu0 %v1838
        %1913 = vmatprep.subr.bf16.mxu0 0
        %1914 = vmatpush1.bf16.msra.mxu0 %v1839
        %1915 = vmatprep.subr.bf16.mxu0 0
        %1916 = vmatpush1.bf16.msra.mxu0 %v1840
        %1917 = vmatprep.subr.bf16.mxu0 0
        %1918 = vmatpush1.bf16.msra.mxu0 %v1841
        %1919 = vmatprep.subr.bf16.mxu0 0
        %1920 = vmatpush1.bf16.msra.mxu0 %v1842
        %1921 = vmatprep.subr.bf16.mxu0 0
        %1922 = vmatpush1.bf16.msra.mxu0 %v1843
        %1923 = vmatprep.subr.bf16.mxu0 0
        %1924 = vmatpush1.bf16.msra.mxu0 %v1844
        %1925 = vmatprep.mubr.bf16.mxu0 %v1634
        %1926 = vmatmul.mubr.bf16.gmra.mrb[0].mxu0 %v1633
        %v1927 = vpop.f32.mrb[0].mxu0
        %v1928 = vadd.f32 0.0, %v1927
        %v1929 = vpop.f32.mrb[0].mxu0
        %v1930 = vpop.f32.mrb[0].mxu0
        %v1931 = vpop.f32.mrb[0].mxu0
        %1932 = vdwg.mxu0
        %1933 = vmatprep.subr.bf16.mxu0 0
        %1934 = vmatpush1.bf16.msra.mxu0 %v1845
        %1935 = vmatprep.subr.bf16.mxu0 0
        %1936 = vmatpush1.bf16.msra.mxu0 %v1846
        %1937 = vmatprep.subr.bf16.mxu0 0
        %1938 = vmatpush1.bf16.msra.mxu0 %v1847
        %1939 = vmatprep.subr.bf16.mxu0 0
        %1940 = vmatpush1.bf16.msra.mxu0 %v1848
        %1941 = vmatprep.subr.bf16.mxu0 0
        %1942 = vmatpush1.bf16.msra.mxu0 %v1849
        %1943 = vmatprep.subr.bf16.mxu0 0
        %1944 = vmatpush1.bf16.msra.mxu0 %v1850
        %1945 = vmatprep.subr.bf16.mxu0 0
        %1946 = vmatpush1.bf16.msra.mxu0 %v1851
        %1947 = vmatprep.subr.bf16.mxu0 0
        %1948 = vmatpush1.bf16.msra.mxu0 %v1852
        %1949 = vmatprep.subr.bf16.mxu0 0
        %1950 = vmatpush1.bf16.msra.mxu0 %v1853
        %1951 = vmatprep.subr.bf16.mxu0 0
        %1952 = vmatpush1.bf16.msra.mxu0 %v1854
        %1953 = vmatprep.subr.bf16.mxu0 0
        %1954 = vmatpush1.bf16.msra.mxu0 %v1855
        %1955 = vmatprep.subr.bf16.mxu0 0
        %1956 = vmatpush1.bf16.msra.mxu0 %v1856
        %1957 = vmatprep.subr.bf16.mxu0 0
        %1958 = vmatpush1.bf16.msra.mxu0 %v1857
        %1959 = vmatprep.subr.bf16.mxu0 0
        %1960 = vmatpush1.bf16.msra.mxu0 %v1858
        %1961 = vmatprep.subr.bf16.mxu0 0
        %1962 = vmatpush1.bf16.msra.mxu0 %v1859
        %1963 = vmatprep.subr.bf16.mxu0 0
        %1964 = vmatpush1.bf16.msra.mxu0 %v1860
        %1965 = vmatprep.mubr.bf16.mxu0 %v1636
        %1966 = vmatmul.mubr.bf16.gmra.mrb[0].mxu0 %v1635
        %v1967 = vpop.f32.mrb[0].mxu0
        %v1968 = vadd.f32 %v1928, %v1967
        %v1969 = vpop.f32.mrb[0].mxu0
        %v1970 = vpop.f32.mrb[0].mxu0
        %v1971 = vpop.f32.mrb[0].mxu0
        %1972 = vdwg.mxu0
        %v1973 = vadd.f32 %v1632, %v1968
        %1974 = vst [vmem:[#allocation2] sm:$0xff] %v1973
        %s1975 = scalar_lea.vmem [#allocation12], 256
        %v1976 = vld [vmem:[%s1975] sm:$0xff]
        %v1977 = vld [vmem:[%s1975 + $0x8] sm:$0xff]
        %v1978 = vld [vmem:[%s1975 + $0x10] sm:$0xff]
        %v1979 = vld [vmem:[%s1975 + $0x18] sm:$0xff]
        %v1980 = vld [vmem:[%s1975 + $0x20] sm:$0xff]
        %v1981 = vld [vmem:[%s1975 + $0x28] sm:$0xff]
        %v1982 = vld [vmem:[%s1975 + $0x30] sm:$0xff]
        %v1983 = vld [vmem:[%s1975 + $0x38] sm:$0xff]
        %v1984 = vld [vmem:[%s1975 + $0x40] sm:$0xff]
        %v1985 = vld [vmem:[%s1975 + $0x48] sm:$0xff]
        %v1986 = vld [vmem:[%s1975 + $0x50] sm:$0xff]
        %v1987 = vld [vmem:[%s1975 + $0x58] sm:$0xff]
        %v1988 = vld [vmem:[%s1975 + $0x60] sm:$0xff]
        %v1989 = vld [vmem:[%s1975 + $0x68] sm:$0xff]
        %v1990 = vld [vmem:[%s1975 + $0x70] sm:$0xff]
        %v1991 = vld [vmem:[%s1975 + $0x78] sm:$0xff]
        %v1992 = vld [vmem:[%s1975 + $0x80] sm:$0xff]
        %v1993 = vld [vmem:[%s1975 + $0x88] sm:$0xff]
        %v1994 = vld [vmem:[%s1975 + $0x90] sm:$0xff]
        %v1995 = vld [vmem:[%s1975 + $0x98] sm:$0xff]
        %v1996 = vld [vmem:[%s1975 + $0xa0] sm:$0xff]
        %v1997 = vld [vmem:[%s1975 + $0xa8] sm:$0xff]
        %v1998 = vld [vmem:[%s1975 + $0xb0] sm:$0xff]
        %v1999 = vld [vmem:[%s1975 + $0xb8] sm:$0xff]
        %v2000 = vld [vmem:[%s1975 + $0xc0] sm:$0xff]
        %v2001 = vld [vmem:[%s1975 + $0xc8] sm:$0xff]
        %v2002 = vld [vmem:[%s1975 + $0xd0] sm:$0xff]
        %v2003 = vld [vmem:[%s1975 + $0xd8] sm:$0xff]
        %v2004 = vld [vmem:[%s1975 + $0xe0] sm:$0xff]
        %v2005 = vld [vmem:[%s1975 + $0xe8] sm:$0xff]
        %v2006 = vld [vmem:[%s1975 + $0xf0] sm:$0xff]
        %v2007 = vld [vmem:[%s1975 + $0xf8] sm:$0xff]
        %s2008 = scalar_lea.vmem %s6, 4
        %v2009 = vld [vmem:[%s2008] sm:$0xf]
        %v2011 = vlaneseq
        %v2012 = vshrl.u32 %v2011, 7
        %v2013 = vsub.s32 0, %v2012
        %v2014 = vrot.slane %v2009, %v2013
        %v2015 = vlaneseq
        %v2016 = vshrl.u32 %v2015, 7
        %v2017 = vsub.s32 1, %v2016
        %v2018 = vrot.slane %v2009, %v2017
        %v2019 = vlaneseq
        %v2020 = vshrl.u32 %v2019, 7
        %v2021 = vsub.s32 2, %v2020
        %v2022 = vrot.slane %v2009, %v2021
        %v2023 = vlaneseq
        %v2024 = vshrl.u32 %v2023, 7
        %v2025 = vsub.s32 3, %v2024
        %v2026 = vrot.slane %v2009, %v2025
        %v2063 = vunpack.c.l.b16 %v1976
        %v2064 = vunpack.c.h.b16 %v1976
        %v2065 = vunpack.c.l.b16 %v1977
        %v2066 = vunpack.c.h.b16 %v1977
        %v2067 = vunpack.c.l.b16 %v1978
        %v2068 = vunpack.c.h.b16 %v1978
        %v2069 = vunpack.c.l.b16 %v1979
        %v2070 = vunpack.c.h.b16 %v1979
        %v2071 = vunpack.c.l.b16 %v1980
        %v2072 = vunpack.c.h.b16 %v1980
        %v2073 = vunpack.c.l.b16 %v1981
        %v2074 = vunpack.c.h.b16 %v1981
        %v2075 = vunpack.c.l.b16 %v1982
        %v2076 = vunpack.c.h.b16 %v1982
        %v2077 = vunpack.c.l.b16 %v1983
        %v2078 = vunpack.c.h.b16 %v1983
        %v2079 = vunpack.c.l.b16 %v1984
        %v2080 = vunpack.c.h.b16 %v1984
        %v2081 = vunpack.c.l.b16 %v1985
        %v2082 = vunpack.c.h.b16 %v1985
        %v2083 = vunpack.c.l.b16 %v1986
        %v2084 = vunpack.c.h.b16 %v1986
        %v2085 = vunpack.c.l.b16 %v1987
        %v2086 = vunpack.c.h.b16 %v1987
        %v2087 = vunpack.c.l.b16 %v1988
        %v2088 = vunpack.c.h.b16 %v1988
        %v2089 = vunpack.c.l.b16 %v1989
        %v2090 = vunpack.c.h.b16 %v1989
        %v2091 = vunpack.c.l.b16 %v1990
        %v2092 = vunpack.c.h.b16 %v1990
        %v2093 = vunpack.c.l.b16 %v1991
        %v2094 = vunpack.c.h.b16 %v1991
        %v2095 = vunpack.c.l.b16 %v1992
        %v2096 = vunpack.c.h.b16 %v1992
        %v2097 = vunpack.c.l.b16 %v1993
        %v2098 = vunpack.c.h.b16 %v1993
        %v2099 = vunpack.c.l.b16 %v1994
        %v2100 = vunpack.c.h.b16 %v1994
        %v2101 = vunpack.c.l.b16 %v1995
        %v2102 = vunpack.c.h.b16 %v1995
        %v2103 = vunpack.c.l.b16 %v1996
        %v2104 = vunpack.c.h.b16 %v1996
        %v2105 = vunpack.c.l.b16 %v1997
        %v2106 = vunpack.c.h.b16 %v1997
        %v2107 = vunpack.c.l.b16 %v1998
        %v2108 = vunpack.c.h.b16 %v1998
        %v2109 = vunpack.c.l.b16 %v1999
        %v2110 = vunpack.c.h.b16 %v1999
        %v2111 = vunpack.c.l.b16 %v2000
        %v2112 = vunpack.c.h.b16 %v2000
        %v2113 = vunpack.c.l.b16 %v2001
        %v2114 = vunpack.c.h.b16 %v2001
        %v2115 = vunpack.c.l.b16 %v2002
        %v2116 = vunpack.c.h.b16 %v2002
        %v2117 = vunpack.c.l.b16 %v2003
        %v2118 = vunpack.c.h.b16 %v2003
        %v2119 = vunpack.c.l.b16 %v2004
        %v2120 = vunpack.c.h.b16 %v2004
        %v2121 = vunpack.c.l.b16 %v2005
        %v2122 = vunpack.c.h.b16 %v2005
        %v2123 = vunpack.c.l.b16 %v2006
        %v2124 = vunpack.c.h.b16 %v2006
        %v2125 = vunpack.c.l.b16 %v2007
        %v2126 = vunpack.c.h.b16 %v2007
        %v2127 = vpack.c.b16 %v2067, %v2063
        %v2128 = vpack.c.b16 %v2068, %v2064
        %v2129 = vpack.c.b16 %v2069, %v2065
        %v2130 = vpack.c.b16 %v2070, %v2066
        %v2131 = vpack.c.b16 %v2075, %v2071
        %v2132 = vpack.c.b16 %v2076, %v2072
        %v2133 = vpack.c.b16 %v2077, %v2073
        %v2134 = vpack.c.b16 %v2078, %v2074
        %v2135 = vpack.c.b16 %v2083, %v2079
        %v2136 = vpack.c.b16 %v2084, %v2080
        %v2137 = vpack.c.b16 %v2085, %v2081
        %v2138 = vpack.c.b16 %v2086, %v2082
        %v2139 = vpack.c.b16 %v2091, %v2087
        %v2140 = vpack.c.b16 %v2092, %v2088
        %v2141 = vpack.c.b16 %v2093, %v2089
        %v2142 = vpack.c.b16 %v2094, %v2090
        %v2143 = vpack.c.b16 %v2099, %v2095
        %v2144 = vpack.c.b16 %v2100, %v2096
        %v2145 = vpack.c.b16 %v2101, %v2097
        %v2146 = vpack.c.b16 %v2102, %v2098
        %v2147 = vpack.c.b16 %v2107, %v2103
        %v2148 = vpack.c.b16 %v2108, %v2104
        %v2149 = vpack.c.b16 %v2109, %v2105
        %v2150 = vpack.c.b16 %v2110, %v2106
        %v2151 = vpack.c.b16 %v2115, %v2111
        %v2152 = vpack.c.b16 %v2116, %v2112
        %v2153 = vpack.c.b16 %v2117, %v2113
        %v2154 = vpack.c.b16 %v2118, %v2114
        %v2155 = vpack.c.b16 %v2123, %v2119
        %v2156 = vpack.c.b16 %v2124, %v2120
        %v2157 = vpack.c.b16 %v2125, %v2121
        %v2158 = vpack.c.b16 %v2126, %v2122
        %2191 = vmatprep.subr.bf16.mxu0 %v2128
        %2192 = vmatpush1.bf16.msra.mxu0 %v2127
        %2193 = vmatprep.subr.bf16.mxu0 %v2132
        %2194 = vmatpush1.bf16.msra.mxu0 %v2131
        %2195 = vmatprep.subr.bf16.mxu0 %v2136
        %2196 = vmatpush1.bf16.msra.mxu0 %v2135
        %2197 = vmatprep.subr.bf16.mxu0 %v2140
        %2198 = vmatpush1.bf16.msra.mxu0 %v2139
        %2199 = vmatprep.subr.bf16.mxu0 %v2144
        %2200 = vmatpush1.bf16.msra.mxu0 %v2143
        %2201 = vmatprep.subr.bf16.mxu0 %v2148
        %2202 = vmatpush1.bf16.msra.mxu0 %v2147
        %2203 = vmatprep.subr.bf16.mxu0 %v2152
        %2204 = vmatpush1.bf16.msra.mxu0 %v2151
        %2205 = vmatprep.subr.bf16.mxu0 %v2156
        %2206 = vmatpush1.bf16.msra.mxu0 %v2155
        %2207 = vmatprep.subr.bf16.mxu0 0
        %2208 = vmatpush1.bf16.msra.mxu0 0
        %2209 = vmatprep.subr.bf16.mxu0 0
        %2210 = vmatpush1.bf16.msra.mxu0 0
        %2211 = vmatprep.subr.bf16.mxu0 0
        %2212 = vmatpush1.bf16.msra.mxu0 0
        %2213 = vmatprep.subr.bf16.mxu0 0
        %2214 = vmatpush1.bf16.msra.mxu0 0
        %2215 = vmatprep.subr.bf16.mxu0 0
        %2216 = vmatpush1.bf16.msra.mxu0 0
        %2217 = vmatprep.subr.bf16.mxu0 0
        %2218 = vmatpush1.bf16.msra.mxu0 0
        %2219 = vmatprep.subr.bf16.mxu0 0
        %2220 = vmatpush1.bf16.msra.mxu0 0
        %2221 = vmatprep.subr.bf16.mxu0 0
        %2222 = vmatpush1.bf16.msra.mxu0 0
        %2223 = vmatprep.mubr.bf16.mxu0 0
        %2224 = vmatmul.mubr.bf16.gmra.mrb[0].mxu0 %v1330
        %v2225 = vpop.f32.mrb[0].mxu0
        %v2226 = vadd.f32 %v2014, %v2225
        %v2227 = vpop.f32.mrb[0].mxu0
        %v2228 = vadd.f32 %v2018, %v2227
        %v2229 = vpop.f32.mrb[0].mxu0
        %v2230 = vpop.f32.mrb[0].mxu0
        %2231 = vdwg.mxu0
        %2232 = vmatprep.subr.bf16.mxu0 %v2130
        %2233 = vmatpush1.bf16.msra.mxu0 %v2129
        %2234 = vmatprep.subr.bf16.mxu0 %v2134
        %2235 = vmatpush1.bf16.msra.mxu0 %v2133
        %2236 = vmatprep.subr.bf16.mxu0 %v2138
        %2237 = vmatpush1.bf16.msra.mxu0 %v2137
        %2238 = vmatprep.subr.bf16.mxu0 %v2142
        %2239 = vmatpush1.bf16.msra.mxu0 %v2141
        %2240 = vmatprep.subr.bf16.mxu0 %v2146
        %2241 = vmatpush1.bf16.msra.mxu0 %v2145
        %2242 = vmatprep.subr.bf16.mxu0 %v2150
        %2243 = vmatpush1.bf16.msra.mxu0 %v2149
        %2244 = vmatprep.subr.bf16.mxu0 %v2154
        %2245 = vmatpush1.bf16.msra.mxu0 %v2153
        %2246 = vmatprep.subr.bf16.mxu0 %v2158
        %2247 = vmatpush1.bf16.msra.mxu0 %v2157
        %2248 = vmatprep.subr.bf16.mxu0 0
        %2249 = vmatpush1.bf16.msra.mxu0 0
        %2250 = vmatprep.subr.bf16.mxu0 0
        %2251 = vmatpush1.bf16.msra.mxu0 0
        %2252 = vmatprep.subr.bf16.mxu0 0
        %2253 = vmatpush1.bf16.msra.mxu0 0
        %2254 = vmatprep.subr.bf16.mxu0 0
        %2255 = vmatpush1.bf16.msra.mxu0 0
        %2256 = vmatprep.subr.bf16.mxu0 0
        %2257 = vmatpush1.bf16.msra.mxu0 0
        %2258 = vmatprep.subr.bf16.mxu0 0
        %2259 = vmatpush1.bf16.msra.mxu0 0
        %2260 = vmatprep.subr.bf16.mxu0 0
        %2261 = vmatpush1.bf16.msra.mxu0 0
        %2262 = vmatprep.subr.bf16.mxu0 0
        %2263 = vmatpush1.bf16.msra.mxu0 0
        %2264 = vmatprep.mubr.bf16.mxu0 0
        %2265 = vmatmul.mubr.bf16.gmra.mrb[0].mxu0 %v1330
        %v2266 = vpop.f32.mrb[0].mxu0
        %v2267 = vadd.f32 %v2022, %v2266
        %v2268 = vpop.f32.mrb[0].mxu0
        %v2269 = vadd.f32 %v2026, %v2268
        %v2270 = vpop.f32.mrb[0].mxu0
        %v2271 = vpop.f32.mrb[0].mxu0
        %2272 = vdwg.mxu0
        %v2273 = vmax.f32 %v2226, 0.0
        %v2274 = vmax.f32 %v2228, 0.0
        %v2275 = vmax.f32 %v2267, 0.0
        %v2276 = vmax.f32 %v2269, 0.0
        %v2277 = vld [vmem:[#allocation2] sm:$0xff]
        %v2278 = vpack.c.bf16 %v2273, %v2273
        %v2279 = vpack.c.bf16 %v2274, %v2274
        %v2280 = vpack.c.bf16 %v2275, %v2275
        %v2281 = vpack.c.bf16 %v2276, %v2276
        %s2282 = scalar_lea.vmem [#allocation14], 256
        %v2283 = vld [vmem:[%s2282] sm:$0xf]
        %v2284 = vld [vmem:[%s2282 + $0x4] sm:$0xf]
        %v2285 = vld [vmem:[%s2282 + $0x8] sm:$0xf]
        %v2286 = vld [vmem:[%s2282 + $0xc] sm:$0xf]
        %v2287 = vld [vmem:[%s2282 + $0x10] sm:$0xf]
        %v2288 = vld [vmem:[%s2282 + $0x14] sm:$0xf]
        %v2289 = vld [vmem:[%s2282 + $0x18] sm:$0xf]
        %v2290 = vld [vmem:[%s2282 + $0x1c] sm:$0xf]
        %v2291 = vld [vmem:[%s2282 + $0x20] sm:$0xf]
        %v2292 = vld [vmem:[%s2282 + $0x24] sm:$0xf]
        %v2293 = vld [vmem:[%s2282 + $0x28] sm:$0xf]
        %v2294 = vld [vmem:[%s2282 + $0x2c] sm:$0xf]
        %v2295 = vld [vmem:[%s2282 + $0x30] sm:$0xf]
        %v2296 = vld [vmem:[%s2282 + $0x34] sm:$0xf]
        %v2297 = vld [vmem:[%s2282 + $0x38] sm:$0xf]
        %v2298 = vld [vmem:[%s2282 + $0x3c] sm:$0xf]
        %v2299 = vld [vmem:[%s2282 + $0x40] sm:$0xf]
        %v2300 = vld [vmem:[%s2282 + $0x44] sm:$0xf]
        %v2301 = vld [vmem:[%s2282 + $0x48] sm:$0xf]
        %v2302 = vld [vmem:[%s2282 + $0x4c] sm:$0xf]
        %v2303 = vld [vmem:[%s2282 + $0x50] sm:$0xf]
        %v2304 = vld [vmem:[%s2282 + $0x54] sm:$0xf]
        %v2305 = vld [vmem:[%s2282 + $0x58] sm:$0xf]
        %v2306 = vld [vmem:[%s2282 + $0x5c] sm:$0xf]
        %v2307 = vld [vmem:[%s2282 + $0x60] sm:$0xf]
        %v2308 = vld [vmem:[%s2282 + $0x64] sm:$0xf]
        %v2309 = vld [vmem:[%s2282 + $0x68] sm:$0xf]
        %v2310 = vld [vmem:[%s2282 + $0x6c] sm:$0xf]
        %v2311 = vld [vmem:[%s2282 + $0x70] sm:$0xf]
        %v2312 = vld [vmem:[%s2282 + $0x74] sm:$0xf]
        %v2313 = vld [vmem:[%s2282 + $0x78] sm:$0xf]
        %v2314 = vld [vmem:[%s2282 + $0x7c] sm:$0xf]
        %v2315 = vld [vmem:[%s2282 + $0x80] sm:$0xf]
        %v2316 = vld [vmem:[%s2282 + $0x84] sm:$0xf]
        %v2317 = vld [vmem:[%s2282 + $0x88] sm:$0xf]
        %v2318 = vld [vmem:[%s2282 + $0x8c] sm:$0xf]
        %v2319 = vld [vmem:[%s2282 + $0x90] sm:$0xf]
        %v2320 = vld [vmem:[%s2282 + $0x94] sm:$0xf]
        %v2321 = vld [vmem:[%s2282 + $0x98] sm:$0xf]
        %v2322 = vld [vmem:[%s2282 + $0x9c] sm:$0xf]
        %v2323 = vld [vmem:[%s2282 + $0xa0] sm:$0xf]
        %v2324 = vld [vmem:[%s2282 + $0xa4] sm:$0xf]
        %v2325 = vld [vmem:[%s2282 + $0xa8] sm:$0xf]
        %v2326 = vld [vmem:[%s2282 + $0xac] sm:$0xf]
        %v2327 = vld [vmem:[%s2282 + $0xb0] sm:$0xf]
        %v2328 = vld [vmem:[%s2282 + $0xb4] sm:$0xf]
        %v2329 = vld [vmem:[%s2282 + $0xb8] sm:$0xf]
        %v2330 = vld [vmem:[%s2282 + $0xbc] sm:$0xf]
        %v2331 = vld [vmem:[%s2282 + $0xc0] sm:$0xf]
        %v2332 = vld [vmem:[%s2282 + $0xc4] sm:$0xf]
        %v2333 = vld [vmem:[%s2282 + $0xc8] sm:$0xf]
        %v2334 = vld [vmem:[%s2282 + $0xcc] sm:$0xf]
        %v2335 = vld [vmem:[%s2282 + $0xd0] sm:$0xf]
        %v2336 = vld [vmem:[%s2282 + $0xd4] sm:$0xf]
        %v2337 = vld [vmem:[%s2282 + $0xd8] sm:$0xf]
        %v2338 = vld [vmem:[%s2282 + $0xdc] sm:$0xf]
        %v2339 = vld [vmem:[%s2282 + $0xe0] sm:$0xf]
        %v2340 = vld [vmem:[%s2282 + $0xe4] sm:$0xf]
        %v2341 = vld [vmem:[%s2282 + $0xe8] sm:$0xf]
        %v2342 = vld [vmem:[%s2282 + $0xec] sm:$0xf]
        %v2343 = vld [vmem:[%s2282 + $0xf0] sm:$0xf]
        %v2344 = vld [vmem:[%s2282 + $0xf4] sm:$0xf]
        %v2345 = vld [vmem:[%s2282 + $0xf8] sm:$0xf]
        %v2346 = vld [vmem:[%s2282 + $0xfc] sm:$0xf]
        %v2411 = vunpack.c.l.b16 %v2283
        %v2412 = vunpack.c.l.b16 %v2284
        %v2413 = vunpack.c.l.b16 %v2285
        %v2414 = vunpack.c.l.b16 %v2286
        %v2415 = vunpack.c.l.b16 %v2287
        %v2416 = vunpack.c.l.b16 %v2288
        %v2417 = vunpack.c.l.b16 %v2289
        %v2418 = vunpack.c.l.b16 %v2290
        %v2419 = vunpack.c.l.b16 %v2291
        %v2420 = vunpack.c.l.b16 %v2292
        %v2421 = vunpack.c.l.b16 %v2293
        %v2422 = vunpack.c.l.b16 %v2294
        %v2423 = vunpack.c.l.b16 %v2295
        %v2424 = vunpack.c.l.b16 %v2296
        %v2425 = vunpack.c.l.b16 %v2297
        %v2426 = vunpack.c.l.b16 %v2298
        %v2427 = vunpack.c.l.b16 %v2299
        %v2428 = vunpack.c.l.b16 %v2300
        %v2429 = vunpack.c.l.b16 %v2301
        %v2430 = vunpack.c.l.b16 %v2302
        %v2431 = vunpack.c.l.b16 %v2303
        %v2432 = vunpack.c.l.b16 %v2304
        %v2433 = vunpack.c.l.b16 %v2305
        %v2434 = vunpack.c.l.b16 %v2306
        %v2435 = vunpack.c.l.b16 %v2307
        %v2436 = vunpack.c.l.b16 %v2308
        %v2437 = vunpack.c.l.b16 %v2309
        %v2438 = vunpack.c.l.b16 %v2310
        %v2439 = vunpack.c.l.b16 %v2311
        %v2440 = vunpack.c.l.b16 %v2312
        %v2441 = vunpack.c.l.b16 %v2313
        %v2442 = vunpack.c.l.b16 %v2314
        %v2443 = vunpack.c.l.b16 %v2315
        %v2444 = vunpack.c.l.b16 %v2316
        %v2445 = vunpack.c.l.b16 %v2317
        %v2446 = vunpack.c.l.b16 %v2318
        %v2447 = vunpack.c.l.b16 %v2319
        %v2448 = vunpack.c.l.b16 %v2320
        %v2449 = vunpack.c.l.b16 %v2321
        %v2450 = vunpack.c.l.b16 %v2322
        %v2451 = vunpack.c.l.b16 %v2323
        %v2452 = vunpack.c.l.b16 %v2324
        %v2453 = vunpack.c.l.b16 %v2325
        %v2454 = vunpack.c.l.b16 %v2326
        %v2455 = vunpack.c.l.b16 %v2327
        %v2456 = vunpack.c.l.b16 %v2328
        %v2457 = vunpack.c.l.b16 %v2329
        %v2458 = vunpack.c.l.b16 %v2330
        %v2459 = vunpack.c.l.b16 %v2331
        %v2460 = vunpack.c.l.b16 %v2332
        %v2461 = vunpack.c.l.b16 %v2333
        %v2462 = vunpack.c.l.b16 %v2334
        %v2463 = vunpack.c.l.b16 %v2335
        %v2464 = vunpack.c.l.b16 %v2336
        %v2465 = vunpack.c.l.b16 %v2337
        %v2466 = vunpack.c.l.b16 %v2338
        %v2467 = vunpack.c.l.b16 %v2339
        %v2468 = vunpack.c.l.b16 %v2340
        %v2469 = vunpack.c.l.b16 %v2341
        %v2470 = vunpack.c.l.b16 %v2342
        %v2471 = vunpack.c.l.b16 %v2343
        %v2472 = vunpack.c.l.b16 %v2344
        %v2473 = vunpack.c.l.b16 %v2345
        %v2474 = vunpack.c.l.b16 %v2346
        %v2475 = vpack.c.b16 %v2412, %v2411
        %v2476 = vpack.c.b16 %v2414, %v2413
        %v2477 = vpack.c.b16 %v2416, %v2415
        %v2478 = vpack.c.b16 %v2418, %v2417
        %v2479 = vpack.c.b16 %v2420, %v2419
        %v2480 = vpack.c.b16 %v2422, %v2421
        %v2481 = vpack.c.b16 %v2424, %v2423
        %v2482 = vpack.c.b16 %v2426, %v2425
        %v2483 = vpack.c.b16 %v2428, %v2427
        %v2484 = vpack.c.b16 %v2430, %v2429
        %v2485 = vpack.c.b16 %v2432, %v2431
        %v2486 = vpack.c.b16 %v2434, %v2433
        %v2487 = vpack.c.b16 %v2436, %v2435
        %v2488 = vpack.c.b16 %v2438, %v2437
        %v2489 = vpack.c.b16 %v2440, %v2439
        %v2490 = vpack.c.b16 %v2442, %v2441
        %v2491 = vpack.c.b16 %v2444, %v2443
        %v2492 = vpack.c.b16 %v2446, %v2445
        %v2493 = vpack.c.b16 %v2448, %v2447
        %v2494 = vpack.c.b16 %v2450, %v2449
        %v2495 = vpack.c.b16 %v2452, %v2451
        %v2496 = vpack.c.b16 %v2454, %v2453
        %v2497 = vpack.c.b16 %v2456, %v2455
        %v2498 = vpack.c.b16 %v2458, %v2457
        %v2499 = vpack.c.b16 %v2460, %v2459
        %v2500 = vpack.c.b16 %v2462, %v2461
        %v2501 = vpack.c.b16 %v2464, %v2463
        %v2502 = vpack.c.b16 %v2466, %v2465
        %v2503 = vpack.c.b16 %v2468, %v2467
        %v2504 = vpack.c.b16 %v2470, %v2469
        %v2505 = vpack.c.b16 %v2472, %v2471
        %v2506 = vpack.c.b16 %v2474, %v2473
        %2539 = vmatprep.subr.bf16.mxu0 0
        %2540 = vmatpush1.bf16.msra.mxu0 %v2475
        %2541 = vmatprep.subr.bf16.mxu0 0
        %2542 = vmatpush1.bf16.msra.mxu0 %v2476
        %2543 = vmatprep.subr.bf16.mxu0 0
        %2544 = vmatpush1.bf16.msra.mxu0 %v2477
        %2545 = vmatprep.subr.bf16.mxu0 0
        %2546 = vmatpush1.bf16.msra.mxu0 %v2478
        %2547 = vmatprep.subr.bf16.mxu0 0
        %2548 = vmatpush1.bf16.msra.mxu0 %v2479
        %2549 = vmatprep.subr.bf16.mxu0 0
        %2550 = vmatpush1.bf16.msra.mxu0 %v2480
        %2551 = vmatprep.subr.bf16.mxu0 0
        %2552 = vmatpush1.bf16.msra.mxu0 %v2481
        %2553 = vmatprep.subr.bf16.mxu0 0
        %2554 = vmatpush1.bf16.msra.mxu0 %v2482
        %2555 = vmatprep.subr.bf16.mxu0 0
        %2556 = vmatpush1.bf16.msra.mxu0 %v2483
        %2557 = vmatprep.subr.bf16.mxu0 0
        %2558 = vmatpush1.bf16.msra.mxu0 %v2484
        %2559 = vmatprep.subr.bf16.mxu0 0
        %2560 = vmatpush1.bf16.msra.mxu0 %v2485
        %2561 = vmatprep.subr.bf16.mxu0 0
        %2562 = vmatpush1.bf16.msra.mxu0 %v2486
        %2563 = vmatprep.subr.bf16.mxu0 0
        %2564 = vmatpush1.bf16.msra.mxu0 %v2487
        %2565 = vmatprep.subr.bf16.mxu0 0
        %2566 = vmatpush1.bf16.msra.mxu0 %v2488
        %2567 = vmatprep.subr.bf16.mxu0 0
        %2568 = vmatpush1.bf16.msra.mxu0 %v2489
        %2569 = vmatprep.subr.bf16.mxu0 0
        %2570 = vmatpush1.bf16.msra.mxu0 %v2490
        %2571 = vmatprep.mubr.bf16.mxu0 %v2279
        %2572 = vmatmul.mubr.bf16.gmra.mrb[0].mxu0 %v2278
        %v2573 = vpop.f32.mrb[0].mxu0
        %v2574 = vadd.f32 0.0, %v2573
        %v2575 = vpop.f32.mrb[0].mxu0
        %v2576 = vpop.f32.mrb[0].mxu0
        %v2577 = vpop.f32.mrb[0].mxu0
        %2578 = vdwg.mxu0
        %2579 = vmatprep.subr.bf16.mxu0 0
        %2580 = vmatpush1.bf16.msra.mxu0 %v2491
        %2581 = vmatprep.subr.bf16.mxu0 0
        %2582 = vmatpush1.bf16.msra.mxu0 %v2492
        %2583 = vmatprep.subr.bf16.mxu0 0
        %2584 = vmatpush1.bf16.msra.mxu0 %v2493
        %2585 = vmatprep.subr.bf16.mxu0 0
        %2586 = vmatpush1.bf16.msra.mxu0 %v2494
        %2587 = vmatprep.subr.bf16.mxu0 0
        %2588 = vmatpush1.bf16.msra.mxu0 %v2495
        %2589 = vmatprep.subr.bf16.mxu0 0
        %2590 = vmatpush1.bf16.msra.mxu0 %v2496
        %2591 = vmatprep.subr.bf16.mxu0 0
        %2592 = vmatpush1.bf16.msra.mxu0 %v2497
        %2593 = vmatprep.subr.bf16.mxu0 0
        %2594 = vmatpush1.bf16.msra.mxu0 %v2498
        %2595 = vmatprep.subr.bf16.mxu0 0
        %2596 = vmatpush1.bf16.msra.mxu0 %v2499
        %2597 = vmatprep.subr.bf16.mxu0 0
        %2598 = vmatpush1.bf16.msra.mxu0 %v2500
        %2599 = vmatprep.subr.bf16.mxu0 0
        %2600 = vmatpush1.bf16.msra.mxu0 %v2501
        %2601 = vmatprep.subr.bf16.mxu0 0
        %2602 = vmatpush1.bf16.msra.mxu0 %v2502
        %2603 = vmatprep.subr.bf16.mxu0 0
        %2604 = vmatpush1.bf16.msra.mxu0 %v2503
        %2605 = vmatprep.subr.bf16.mxu0 0
        %2606 = vmatpush1.bf16.msra.mxu0 %v2504
        %2607 = vmatprep.subr.bf16.mxu0 0
        %2608 = vmatpush1.bf16.msra.mxu0 %v2505
        %2609 = vmatprep.subr.bf16.mxu0 0
        %2610 = vmatpush1.bf16.msra.mxu0 %v2506
        %2611 = vmatprep.mubr.bf16.mxu0 %v2281
        %2612 = vmatmul.mubr.bf16.gmra.mrb[0].mxu0 %v2280
        %v2613 = vpop.f32.mrb[0].mxu0
        %v2614 = vadd.f32 %v2574, %v2613
        %v2615 = vpop.f32.mrb[0].mxu0
        %v2616 = vpop.f32.mrb[0].mxu0
        %v2617 = vpop.f32.mrb[0].mxu0
        %2618 = vdwg.mxu0
        %v2619 = vadd.f32 %v2277, %v2614
        %2620 = vst [vmem:[#allocation2] sm:$0xff] %v2619
        %v2621 = vld [vmem:[#allocation2] sm:$0xff]
        %v2622 = vlaneseq
        %v2623 = vshrl.u32 %v2622, 7
        %v2624 = vsub.s32 4, %v2623
        %v2625 = vrot.slane %v463, %v2624
        %v2626 = vadd.f32 %v2621, %v2625
        %v2627 = vadd.f32 %v1329, %v2626
        %2628 = vadd.xlane.f32.xlu0 %v2627
        %v2629 = vpop.xlane.xlu0 %2628
        %v2630 = vmul.f32 %v2629, %v1310
        %v2631 = vsub.f32 %v2627, %v2630
        %v2632 = vmul.f32 %v2631, %v2631
        %2633 = vadd.xlane.f32.xlu0 %v2632
        %v2634 = vpop.xlane.xlu0 %2633
        %v2635 = vmul.f32 %v2634, %v1310
        %v2636 = vadd.f32 %v2635, 1e-05
        %v2637 = vrsqrt.pop %v2636
        %v2638 = vmul.f32 %v2631, %v2637
        %v2639 = vlaneseq
        %v2640 = vshrl.u32 %v2639, 7
        %v2641 = vsub.s32 7, %v2640
        %v2642 = vrot.slane %v463, %v2641
        %v2643 = vmul.f32 %v2638, %v2642
        %v2644 = vlaneseq
        %v2645 = vshrl.u32 %v2644, 7
        %v2646 = vsub.s32 0, %v2645
        %v2647 = vrot.slane %v464, %v2646
        %v2648 = vadd.f32 %v2643, %v2647
        %2649 = vst [vmem:[%s456] sm:$0xff] %v2648
        %s2650 = sand.u32 %s238, 1
        %s2651 = scalar_lea.sflag [#allocation5], %s2650
        %s2652 = sand.u32 %s238, 1
        %s2653 = smul.addr %s2652, 8
        %s2654 = scalar_lea.vmem [#allocation15], %s2653
        // Predicated region
        $region85: #{tpu_custom_call.1} parent=55 // pred_check
          %p2655 = pneg %p248
        $region86: #{tpu_custom_call.1} parent=55 // pred_check_branch
          %2657 = sbr.rel (%p2655) target = $region88
        $region87: #{tpu_custom_call.1} parent=55 // pred_region
          %s2659 = ssub.s32 128, 128
          %2660 = vsyncadd %s2651, %s2659
          %s2661 = smul.addr %s31, 128
          %s2662 = scalar_lea.hbm %s9, %s2661
          %s2664 = sshll.u32 %s2654, 4
          %s2665 = int_to_ptr.vmem [resolvable:$true] %s2664
          %2667 = dma.vmem_to_hbm [thread:$0]  %s2665, 128, %s2662, %s2651
        $region88: #{tpu_custom_call.1} parent=55 // pred_fallthru
          _
      $region56: #{tpu_custom_call.1} parent=5 // pred_fallthru
        _
      %p2668 = scmp.le.s32.totalorder 2, %s26
      // Predicated region
      $region89: #{tpu_custom_call.1} parent=5 // pred_check
        %p2669 = pneg %p2668
      $region90: #{tpu_custom_call.1} parent=5 // pred_check_branch
        %2671 = sbr.rel (%p2669) target = $region92
      $region91: #{tpu_custom_call.1} parent=5 // pred_region
        %s2672 = ssub.s32 %s26, 2
        // Predicated region
        $region93: #{tpu_custom_call.1} parent=91 // pred_check
          %p2673 = pneg %p254
        $region94: #{tpu_custom_call.1} parent=91 // pred_check_branch
          %2675 = sbr.rel (%p2673) target = $region96
        $region95: #{tpu_custom_call.1} parent=91 // pred_region
          %s2676 = sand.u32 %s239, 1
          %s2677 = scalar_lea.sflag [#allocation5], %s2676
          %s2678 = sand.u32 %s239, 1
          %s2679 = smul.addr %s2678, 8
          %s2680 = scalar_lea.vmem [#allocation15], %s2679
          %2681 = dma.done %s2677, 128
        $region96: #{tpu_custom_call.1} parent=91 // pred_fallthru
          _
      $region92: #{tpu_custom_call.1} parent=5 // pred_fallthru
        _
    $region6: #{tpu_custom_call.1} parent=1 // loop_footer
      %s30 = sadd.s32 1, %s26
    $region7: #{tpu_custom_call.1} parent=1 // loop_footer_branch
      %25 = sbr.rel target = $region3
    $region8: #{tpu_custom_call.1} parent=1 // loop_exit
      _
    %2682 = vsyncpa [#allocation4], 1
    %s2683 = scalar_lea.sflag [#allocation4], 1
    %2684 = vsyncpa %s2683, 1
    %2685 = vsyncpa [#allocation7], 1
    %s2686 = scalar_lea.sflag [#allocation7], 1
    %2687 = vsyncpa %s2686, 1
    %2688 = vsyncpa [#allocation10], 1
    %2689 = vsyncpa [#allocation13], 1
    %2690 = vsyncpa [#allocation5], 1
    %s2691 = scalar_lea.sflag [#allocation5], 1
    %2692 = vsyncpa %s2691, 1

</llo_original>
